<compile_context>
chip_gen: v7x
topology: tpu7x:2x2x1
jax: 0.10.0
libtpu: 0.0.40
codegen_flags: <defaults>
</compile_context>

<pallas_src>
import functools

import jax
import jax.numpy as jnp
from jax.experimental import pallas as pl
from jax.experimental.pallas import tpu as pltpu

# Scoped VMEM request: safe on v5e/v6e (128 MiB physical) and under v7x's 64 MiB.
_VMEM_LIMIT = 48 * 1024 * 1024


def _full_spec(shape):
    """BlockSpec covering the whole array as a single VMEM-resident block."""
    return pl.BlockSpec(shape, lambda i: (0,) * len(shape))


def _row_block(n, max_block=256):
    """Largest row block <= max_block that divides n (multiple of 8 when tiling)."""
    if n <= max_block:
        return n
    for cand in range(max_block, 7, -8):
        if n % cand == 0:
            return cand
    return n


def _pad2d(a, rows, cols):
    """Zero-pad a 2-D array up to (rows, cols)."""
    out = jnp.zeros((rows, cols), a.dtype)
    return out.at[: a.shape[0], : a.shape[1]].set(a)


# ----------------------------- fused attention kernel -----------------------------

def _fused_attention_kernel(x_ref, w_ref, qb_ref, expand_ref, o_ref, *, split, s_pad):
    # x_ref:      (bn*s_pad, D)  bf16, rows grouped per node (padded rows are zeros)
    # w_ref:      (D, H*P)       bf16, per-head projection weights stacked on columns
    # qb_ref:     (H*P, H)       bf16, block-diagonal per-head query vectors
    # expand_ref: (H, H*P)       bf16, block pattern: 1s over each head's lane block
    # o_ref:      (bn, H*P)      f32, lane-dense output slab
    bn = o_ref.shape[0]
    hp = o_ref.shape[1]
    nh = qb_ref.shape[1]

    # One big MXU matmul for all heads: bf16 operands, f32 accumulation.
    xw = jnp.dot(x_ref[...], w_ref[...], preferred_element_type=jnp.float32)    # (bn*S, HP)
    # All heads' attention scores at once (heads on the lane axis, stays in vregs).
    s = jnp.dot(xw.astype(jnp.bfloat16), qb_ref[...],
                preferred_element_type=jnp.float32)                              # (bn*S, H)
    s = jnp.where(s > 0, s, 0.2 * s)                                             # LeakyReLU(0.2)

    # Reshape-based per-segment softmax (segments are contiguous s_pad-row blocks).
    s3 = s.reshape(bn, s_pad, nh)
    valid = jax.lax.broadcasted_iota(jnp.int32, (bn, s_pad, nh), 1) < split
    neg_inf = jnp.full_like(s3, -jnp.inf)
    m = jnp.max(jnp.where(valid, s3, neg_inf), axis=1, keepdims=True)            # true per-seg max
    e = jnp.where(valid, jnp.exp(s3 - m), 0.0)
    denom = jnp.sum(e, axis=1, keepdims=True)
    att = (e * pl.reciprocal(denom, approx=True)).reshape(bn * s_pad, nh)        # (bn*S, H)

    # Broadcast each head's weight over its 128-lane block with one MXU matmul.
    att_full = jnp.dot(att.astype(jnp.bfloat16), expand_ref[...],
                       preferred_element_type=jnp.float32)                        # (bn*S, HP)
    pooled = (xw * att_full).reshape(bn, s_pad, hp).sum(axis=1)                   # (bn, HP)
    o_ref[...] = pooled


def attention_module(x, att_params, *, num_heads=4, split=5, input_dim=512):
    N = x.shape[0]
    per_dim = input_dim // num_heads
    hp = num_heads * per_dim
    s_pad = 8                                            # pad split 5 -> 8 (sublane aligned)

    x3 = x.reshape(N, split, input_dim)
    x_pad = jnp.zeros((N, s_pad, input_dim), jnp.bfloat16)
    x_pad = x_pad.at[:, :split, :].set(x3.astype(jnp.bfloat16))
    x_flat = x_pad.reshape(N * s_pad, input_dim)

    w_stacked = jnp.concatenate(att_params['W'], axis=1).astype(jnp.bfloat16)    # (D, H*P)
    qblock = jnp.zeros((hp, num_heads), jnp.float32)
    for h in range(num_heads):
        qblock = qblock.at[h * per_dim:(h + 1) * per_dim, h].set(att_params['q'][h][:, 0])
    qblock = qblock.astype(jnp.bfloat16)
    expand = (jnp.arange(num_heads)[:, None]
              == (jnp.arange(hp) // per_dim)[None, :]).astype(jnp.bfloat16)      # (H, H*P)

    bn = _row_block(N)
    grid = (N // bn,)
    kernel = functools.partial(_fused_attention_kernel, split=split, s_pad=s_pad)
    return pl.pallas_call(
        kernel,
        out_shape=jax.ShapeDtypeStruct((N, hp), jnp.float32),
        grid=grid,
        in_specs=[pl.BlockSpec((bn * s_pad, input_dim), lambda i: (i, 0)),
                  _full_spec(w_stacked.shape),
                  _full_spec(qblock.shape),
                  _full_spec(expand.shape)],
        out_specs=pl.BlockSpec((bn, hp), lambda i: (i, 0)),
        compiler_params=pltpu.CompilerParams(
            dimension_semantics=("parallel",), vmem_limit_bytes=_VMEM_LIMIT),
    )(x_flat, w_stacked, qblock, expand)


# -------------------- fused hetero conv (+ optional HeteroLinear head) --------------------

def _fused_conv_kernel(*refs, num_edge_types, scale, apply_relu, has_head):
    # refs = [x_dst,
    #         (x_src, w_src, w_tgt, src_col, tgt_row, inv_deg) * num_edge_types,
    #         (w_head, b_head)?,
    #         o_ref, (head_ref)?]
    x_dst_ref = refs[0]
    n_out = 2 if has_head else 1
    out_refs = refs[len(refs) - n_out:]
    o_ref = out_refs[0]
    bd = o_ref.shape[0]
    row0 = pl.program_id(0) * bd

    x_dst = x_dst_ref[...]                                  # bf16
    acc = jnp.zeros(o_ref.shape, jnp.float32)
    base = 1
    for _ in range(num_edge_types):
        (x_src_ref, w_src_ref, w_tgt_ref,
         src_col_ref, tgt_row_ref, inv_ref) = refs[base:base + 6]
        base += 6
        n_src = x_src_ref.shape[0]
        n_edges = tgt_row_ref.shape[1]

        tgt_x = jnp.dot(x_dst, w_tgt_ref[...], preferred_element_type=jnp.float32)       # (bd, HP)
        src_x = jnp.dot(x_src_ref[...], w_src_ref[...], preferred_element_type=jnp.float32)

        # TODO(synk): one-hot gather/scatter kept only for tiny graphs; use
        # scalar-prefetched edge indices + DMA row gathers at realistic edge counts.
        gather = (jax.lax.broadcasted_iota(jnp.int32, (n_edges, n_src), 1)
                  == src_col_ref[...]).astype(jnp.bfloat16)                               # (E, n_src)
        gathered = jnp.dot(gather, src_x.astype(jnp.bfloat16),
                           preferred_element_type=jnp.float32)                            # (E, HP)
        scatter = (row0 + jax.lax.broadcasted_iota(jnp.int32, (bd, n_edges), 0)
                   == tgt_row_ref[...]).astype(jnp.bfloat16)                              # (bd, E)
        agg = jnp.dot(scatter, gathered.astype(jnp.bfloat16),
                      preferred_element_type=jnp.float32) * inv_ref[...]                  # scatter-mean
        acc = acc + tgt_x + agg

    out = acc * scale                                       # mean over edge types
    if apply_relu:                                          # ReLU only when configured
        out = jnp.maximum(out, 0.0)
    o_ref[...] = out

    if has_head:                                            # fused HeteroLinear epilogue
        w_head_ref = refs[1 + 6 * num_edge_types]
        b_head_ref = refs[2 + 6 * num_edge_types]
        head_ref = out_refs[1]
        head_ref[...] = (jnp.dot(out.astype(jnp.bfloat16), w_head_ref[...],
                                 preferred_element_type=jnp.float32) + b_head_ref[...])


def hetero_sage_conv(x_dict, edge_index_dict, layer_params, div, relu_flag,
                     head_params=None):
    """One fused Pallas kernel per destination node type.  Returns (x_out, head_out|None)."""
    by_dst = {}
    for k, eidx in edge_index_dict.items():
        by_dst.setdefault(k[-1], []).append((k, eidx))

    x_out, head_out = {}, {}
    for dst, edges in by_dst.items():
        x_dst = x_dict[dst]
        n_dst, in_dst = x_dst.shape
        bd = _row_block(n_dst)
        grid = (n_dst // bd,)

        inputs = [x_dst.astype(jnp.bfloat16)]
        in_specs = [pl.BlockSpec((bd, in_dst), lambda i: (i, 0))]
        hpad = 128
        for k, eidx in edges:
            name = '__'.join(k)
            x_src = x_dict[k[0]].astype(jnp.bfloat16)
            w_src = layer_params[name + '__source']
            w_tgt = layer_params[name + '__target']
            hidden = w_tgt.shape[1]
            hpad = max(128, -(-hidden // 128) * 128)        # pad hidden -> lane-dense stores
            w_src_p = _pad2d(w_src, x_src.shape[1], hpad).astype(jnp.bfloat16)
            w_tgt_p = _pad2d(w_tgt, in_dst, hpad).astype(jnp.bfloat16)
            src_col = eidx[0].reshape(-1, 1).astype(jnp.int32)        # (E, 1)
            tgt_row = eidx[1].reshape(1, -1).astype(jnp.int32)        # (1, E)
            # Host-precomputed scatter normalization (in-degree), per the review.
            deg = jnp.zeros((n_dst,), jnp.float32).at[eidx[1]].add(1.0)
            inv_deg = (1.0 / jnp.maximum(deg, 1.0)).reshape(n_dst, 1)
            for a in (x_src, w_src_p, w_tgt_p, src_col, tgt_row):
                inputs.append(a)
                in_specs.append(_full_spec(a.shape))
            inputs.append(inv_deg)
            in_specs.append(pl.BlockSpec((bd, 1), lambda i: (i, 0)))

        has_head = head_params is not None and dst in head_params
        out_ch = None
        if has_head:
            w_h = head_params[dst]['w']
            b_h = head_params[dst]['b'].reshape(1, -1)
            out_ch = w_h.shape[1]
            opad = max(128, -(-out_ch // 128) * 128)
            w_h_p = _pad2d(w_h, hpad, opad).astype(jnp.bfloat16)
            b_h_p = _pad2d(b_h, 1, opad)
            inputs += [w_h_p, b_h_p]
            in_specs += [_full_spec(w_h_p.shape), _full_spec(b_h_p.shape)]
            out_shape = (jax.ShapeDtypeStruct((n_dst, hpad), jnp.float32),
                         jax.ShapeDtypeStruct((n_dst, opad), jnp.float32))
            out_specs = (pl.BlockSpec((bd, hpad), lambda i: (i, 0)),
                         pl.BlockSpec((bd, opad), lambda i: (i, 0)))
        else:
            out_shape = jax.ShapeDtypeStruct((n_dst, hpad), jnp.float32)
            out_specs = pl.BlockSpec((bd, hpad), lambda i: (i, 0))

        kernel = functools.partial(_fused_conv_kernel,
                                   num_edge_types=len(edges),
                                   scale=1.0 / float(div[dst]),
                                   apply_relu=bool(relu_flag),
                                   has_head=has_head)
        result = pl.pallas_call(
            kernel,
            out_shape=out_shape,
            grid=grid,
            in_specs=in_specs,
            out_specs=out_specs,
            compiler_params=pltpu.CompilerParams(
                dimension_semantics=("parallel",), vmem_limit_bytes=_VMEM_LIMIT),
        )(*inputs)

        if has_head:
            x_out[dst] = result[0]
            head_out[dst] = result[1][:, :out_ch]
        else:
            x_out[dst] = result
    return x_out, (head_out if head_params is not None else None)


# ----------------------------- forward (glue in plain JAX) -----------------------------

def hetero_sage_forward(x_dict, edge_index_dict, params, config, multi=True):
    concat = config['model']['concat']
    relu_flag = config['model']['ReLU']
    hidden = config['model']['hidden_channels']
    x_dict = dict(x_dict)
    x_dict_all = {nt: [] for nt in x_dict}
    if multi:
        x_dict['spot'] = attention_module(x_dict['spot'], params['att'])

    num_layers = len(params['layers'])
    out_dict = None
    for li, (layer_params, div) in enumerate(params['layers']):
        is_last = (li == num_layers - 1)
        x_dict, head = hetero_sage_conv(
            x_dict, edge_index_dict, layer_params, div, relu_flag,
            head_params=params['lin'] if is_last else None)
        if concat:
            for nt in x_dict:
                x_dict_all[nt].append(x_dict[nt])
        if is_last:
            out_dict = head

    # Hidden channels were zero-padded to 128 lanes for lane-dense stores; slice back.
    if concat:
        x_ret = {nt: jnp.mean(jnp.stack(xs, axis=1), axis=1)[:, :hidden]
                 for nt, xs in x_dict_all.items()}
    else:
        x_ret = {nt: v[:, :hidden] for nt, v in x_dict.items()}
    return x_ret, out_dict


# ----------------------------- pure-JAX reference (for checking) -----------------------------

def _reference_forward(x_dict, edge_index_dict, params, config, multi=True,
                       num_heads=4, split=5):
    concat = config['model']['concat']
    relu_flag = config['model']['ReLU']
    bf = jnp.bfloat16

    def bdot(a, b):  # same matmul precision as the kernels (bf16 operands, f32 acc)
        return jnp.dot(a.astype(bf), b.astype(bf), preferred_element_type=jnp.float32)

    def ref_attention(x, att):
        N = x.shape[0]
        D = att['W'][0].shape[0]
        x3 = x.reshape(N, split, D)
        outs = []
        for h in range(num_heads):
            xw = bdot(x3, att['W'][h])                                  # (N, S, P)
            s = bdot(xw, att['q'][h])                                   # (N, S, 1)
            s = jnp.where(s > 0, s, 0.2 * s)
            a = jax.nn.softmax(s, axis=1)
            outs.append(jnp.sum(xw * a, axis=1))
        return jnp.concatenate(outs, axis=1)

    x_dict = dict(x_dict)
    x_all = {nt: [] for nt in x_dict}
    if multi:
        x_dict['spot'] = ref_attention(x_dict['spot'], params['att'])
    for layer_params, div in params['layers']:
        x_new = {}
        for k, eidx in edge_index_dict.items():
            src, dst = k[0], k[-1]
            name = '__'.join(k)
            src_x = bdot(x_dict[src], layer_params[name + '__source'])
            tgt_x = bdot(x_dict[dst], layer_params[name + '__target'])
            gathered = jnp.take(src_x, eidx[0], axis=0)
            onehot = (jnp.arange(tgt_x.shape[0])[:, None] == eidx[1][None, :]
                      ).astype(jnp.float32)
            counts = onehot.sum(axis=1, keepdims=True)
            agg = (onehot / jnp.maximum(counts, 1.0)) @ gathered
            x_new[dst] = x_new.get(dst, 0.0) + tgt_x + agg
        x_dict = {kk: v / float(div[kk]) for kk, v in x_new.items()}
        if relu_flag:
            x_dict = {kk: jnp.maximum(v, 0.0) for kk, v in x_dict.items()}
        if concat:
            for nt in x_dict:
                x_all[nt].append(x_dict[nt])
    out_dict = {nt: bdot(x_dict[nt], params['lin'][nt]['w']) + params['lin'][nt]['b']
                for nt in x_dict}
    if concat:
        x_ret = {nt: jnp.mean(jnp.stack(xs, axis=1), axis=1) for nt, xs in x_all.items()}
    else:
        x_ret = x_dict
    return x_ret, out_dict


# ----------------------------- deterministic init -----------------------------

def glorot(key, shape):
    fan_in, fan_out = shape
    limit = (6.0 / (fan_in + fan_out)) ** 0.5
    return jax.random.uniform(key, shape, jnp.float32, -limit, limit)


def xavier_uniform(key, shape, gain):
    fan_out, fan_in = shape  # torch convention for 2D params
    limit = gain * (6.0 / (fan_in + fan_out)) ** 0.5
    return jax.random.uniform(key, shape, jnp.float32, -limit, limit)


if __name__ == "__main__":
    key = jax.random.PRNGKey(0)
    config = {'model': {'hidden_channels': 32, 'num_layers': 2, 'concat': True,
                        'ReLU': True, 'dropout': 0.0}}
    hidden = config['model']['hidden_channels']
    num_layers = config['model']['num_layers']

    n_spot, n_user = 8, 8
    split, att_dim, num_heads = 5, 512, 4
    per_dim = att_dim // num_heads
    user_feat = 16
    n_edges = 16

    keys = iter(jax.random.split(key, 40))

    x_dict = {
        'spot': jax.random.normal(next(keys), (n_spot, split * att_dim), jnp.float32),
        'user': jax.random.normal(next(keys), (n_user, user_feat), jnp.float32),
    }
    edge_index_dict = {
        ('user', 'visits', 'spot'): jnp.stack([
            jax.random.randint(next(keys), (n_edges,), 0, n_user),
            jax.random.randint(next(keys), (n_edges,), 0, n_spot)]),
        ('spot', 'rev_visits', 'user'): jnp.stack([
            jax.random.randint(next(keys), (n_edges,), 0, n_spot),
            jax.random.randint(next(keys), (n_edges,), 0, n_user)]),
    }

    first_in = {'spot': att_dim, 'user': user_feat}
    mid_in = {'spot': hidden, 'user': hidden}

    att_params = {
        'W': [glorot(next(keys), (att_dim, per_dim)) for _ in range(num_heads)],
        'q': [xavier_uniform(next(keys), (per_dim, 1), 1.414) for _ in range(num_heads)],
    }

    def make_conv_params(in_dict):
        p, div = {}, {}
        for k in edge_index_dict:
            name = '__'.join(k)
            p[name + '__source'] = glorot(next(keys), (in_dict[k[0]], hidden))
            p[name + '__target'] = glorot(next(keys), (in_dict[k[-1]], hidden))
            div[k[-1]] = div.get(k[-1], 0) + 1
        return p, div

    layers = [make_conv_params(first_in)]
    for _ in range(num_layers - 1):
        layers.append(make_conv_params(mid_in))

    lin_params = {nt: {'w': glorot(next(keys), (hidden, 1)),
                       'b': jnp.zeros((1,), jnp.float32)} for nt in x_dict}

    params = {'att': att_params, 'layers': layers, 'lin': lin_params}

    x_out, out_dict = hetero_sage_forward(x_dict, edge_index_dict, params, config,
                                          multi=True)
    jax.block_until_ready((x_out, out_dict))

    # shape checks
    assert x_out['spot'].shape == (n_spot, hidden)
    assert x_out['user'].shape == (n_user, hidden)
    assert out_dict['spot'].shape == (n_spot, 1)
    assert out_dict['user'].shape == (n_user, 1)

    # numeric check vs. pure-JAX reference (same bf16 matmul precision)
    x_ref, out_ref = _reference_forward(x_dict, edge_index_dict, params, config,
                                        multi=True)
    for nt in x_out:
        assert jnp.allclose(x_out[nt], x_ref[nt], rtol=2e-2, atol=2e-2), nt
    for nt in out_dict:
        assert jnp.allclose(out_dict[nt], out_ref[nt], rtol=2e-2, atol=2e-2), nt

    print("KERNEL_OK")
</pallas_src>

<mosaic_0001>
module attributes {stable_mosaic.version = 11 : i64} {
  func.func @_fused_attention_kernel(%arg0: i32, %arg1: memref<64x512xbf16, #tpu.memory_space<vmem>>, %arg2: memref<512x512xbf16, #tpu.memory_space<vmem>>, %arg3: memref<512x4xbf16, #tpu.memory_space<vmem>>, %arg4: memref<4x512xbf16, #tpu.memory_space<vmem>>, %arg5: memref<8x512xf32, #tpu.memory_space<vmem>>) attributes {dimension_semantics = [#tpu.dimension_semantics<parallel>], iteration_bounds = array<i64: 1>, scalar_prefetch = 0 : i64, scratch_operands = 0 : i64, tpu.core_type = #tpu.core_type<tc>, window_params = [{transform_indices = @transform_0, window_bounds = array<i64: 64, 512>}, {pipeline_mode = #tpu.pipeline_mode<synchronous>, transform_indices = @transform_1, window_bounds = array<i64: 512, 512>}, {pipeline_mode = #tpu.pipeline_mode<synchronous>, transform_indices = @transform_2, window_bounds = array<i64: 512, 4>}, {pipeline_mode = #tpu.pipeline_mode<synchronous>, transform_indices = @transform_3, window_bounds = array<i64: 4, 512>}, {transform_indices = @transform_4, window_bounds = array<i64: 8, 512>}]} {
    %c0 = arith.constant 0 : index
    %c0_0 = arith.constant 0 : index
    %0 = vector.load %arg1[%c0, %c0_0] : memref<64x512xbf16, #tpu.memory_space<vmem>>, vector<64x512xbf16>
    %c0_1 = arith.constant 0 : index
    %c0_2 = arith.constant 0 : index
    %1 = vector.load %arg2[%c0_1, %c0_2] : memref<512x512xbf16, #tpu.memory_space<vmem>>, vector<512x512xbf16>
    %cst = arith.constant dense<0.000000e+00> : vector<64x512xf32>
    %2 = tpu.matmul %0, %1, %cst {dimension_numbers = #tpu.dot_dimension_numbers<[1], [0], [0], [1], [0, 0, 1, 1], [], []>} : vector<64x512xbf16>, vector<512x512xbf16>, vector<64x512xf32> -> vector<64x512xf32>
    %3 = arith.truncf %2 : vector<64x512xf32> to vector<64x512xbf16>
    %c0_3 = arith.constant 0 : index
    %c0_4 = arith.constant 0 : index
    %4 = vector.load %arg3[%c0_3, %c0_4] : memref<512x4xbf16, #tpu.memory_space<vmem>>, vector<512x4xbf16>
    %cst_5 = arith.constant dense<0.000000e+00> : vector<64x4xf32>
    %5 = tpu.matmul %3, %4, %cst_5 {dimension_numbers = #tpu.dot_dimension_numbers<[1], [0], [0], [1], [0, 0, 1, 1], [], []>} : vector<64x512xbf16>, vector<512x4xbf16>, vector<64x4xf32> -> vector<64x4xf32>
    %cst_6 = arith.constant 0.000000e+00 : f32
    %6 = vector.broadcast %cst_6 : f32 to vector<64x4xf32>
    %7 = arith.cmpf ogt, %5, %6 : vector<64x4xf32>
    %cst_7 = arith.constant 2.000000e-01 : f32
    %8 = vector.broadcast %cst_7 : f32 to vector<64x4xf32>
    %9 = arith.mulf %8, %5 : vector<64x4xf32>
    %10 = arith.select %7, %5, %9 : vector<64x4xi1>, vector<64x4xf32>
    %11 = vector.shape_cast %10 : vector<64x4xf32> to vector<8x8x4xf32>
    %12 = tpu.iota {dimensions = array<i32: 1>} : vector<8x8x4xi32>
    %c5_i32 = arith.constant 5 : i32
    %13 = vector.broadcast %c5_i32 : i32 to vector<8x8x4xi32>
    %14 = arith.cmpi slt, %12, %13 : vector<8x8x4xi32>
    %cst_8 = arith.constant 0xFF800000 : f32
    %15 = vector.broadcast %cst_8 : f32 to vector<8x8x4xf32>
    %16 = arith.select %14, %11, %15 : vector<8x8x4xi1>, vector<8x8x4xf32>
    %cst_9 = arith.constant dense<0xFF800000> : vector<8x4xf32>
    %17 = vector.multi_reduction <maximumf>, %16, %cst_9 [1] : vector<8x8x4xf32> to vector<8x4xf32>
    %18 = vector.shape_cast %17 : vector<8x4xf32> to vector<8x1x4xf32>
    %19 = vector.broadcast %18 : vector<8x1x4xf32> to vector<8x8x4xf32>
    %20 = arith.subf %11, %19 : vector<8x8x4xf32>
    %21 = math.exp %20 : vector<8x8x4xf32>
    %cst_10 = arith.constant 0.000000e+00 : f32
    %22 = vector.broadcast %cst_10 : f32 to vector<8x8x4xf32>
    %23 = arith.select %14, %21, %22 : vector<8x8x4xi1>, vector<8x8x4xf32>
    %cst_11 = arith.constant dense<0.000000e+00> : vector<8x4xf32>
    %24 = vector.multi_reduction <add>, %23, %cst_11 [1] : vector<8x8x4xf32> to vector<8x4xf32>
    %25 = vector.shape_cast %24 : vector<8x4xf32> to vector<8x1x4xf32>
    %26 = tpu.reciprocal %25 {approx = true} : vector<8x1x4xf32> -> vector<8x1x4xf32>
    %27 = vector.broadcast %26 : vector<8x1x4xf32> to vector<8x8x4xf32>
    %28 = arith.mulf %23, %27 : vector<8x8x4xf32>
    %29 = vector.shape_cast %28 : vector<8x8x4xf32> to vector<64x4xf32>
    %30 = arith.truncf %29 : vector<64x4xf32> to vector<64x4xbf16>
    %c0_12 = arith.constant 0 : index
    %c0_13 = arith.constant 0 : index
    %31 = vector.load %arg4[%c0_12, %c0_13] : memref<4x512xbf16, #tpu.memory_space<vmem>>, vector<4x512xbf16>
    %cst_14 = arith.constant dense<0.000000e+00> : vector<64x512xf32>
    %32 = tpu.matmul %30, %31, %cst_14 {dimension_numbers = #tpu.dot_dimension_numbers<[1], [0], [0], [1], [0, 0, 1, 1], [], []>} : vector<64x4xbf16>, vector<4x512xbf16>, vector<64x512xf32> -> vector<64x512xf32>
    %33 = arith.mulf %2, %32 : vector<64x512xf32>
    %34 = vector.shape_cast %33 : vector<64x512xf32> to vector<8x8x512xf32>
    %cst_15 = arith.constant dense<0.000000e+00> : vector<8x512xf32>
    %35 = vector.multi_reduction <add>, %34, %cst_15 [1] : vector<8x8x512xf32> to vector<8x512xf32>
    %c0_16 = arith.constant 0 : index
    %c0_17 = arith.constant 0 : index
    %36 = vector.load %arg5[%c0_16, %c0_17] : memref<8x512xf32, #tpu.memory_space<vmem>>, vector<8x512xf32>
    tpu.vector_store %arg5[%c0_16, %c0_17], %35 {strides = array<i32>} : memref<8x512xf32, #tpu.memory_space<vmem>>, vector<8x512xf32>,
    return
  }
  func.func @transform_0(%arg0: i32) -> (i32, i32) {
    %c0_i32 = arith.constant 0 : i32
    %c0_i32_0 = arith.constant 0 : i32
    return %arg0, %c0_i32 : i32, i32
  }
  func.func @transform_1(%arg0: i32) -> (i32, i32) {
    %c0_i32 = arith.constant 0 : i32
    %c0_i32_0 = arith.constant 0 : i32
    %c0_i32_1 = arith.constant 0 : i32
    return %c0_i32, %c0_i32_0 : i32, i32
  }
  func.func @transform_2(%arg0: i32) -> (i32, i32) {
    %c0_i32 = arith.constant 0 : i32
    %c0_i32_0 = arith.constant 0 : i32
    %c0_i32_1 = arith.constant 0 : i32
    return %c0_i32, %c0_i32_0 : i32, i32
  }
  func.func @transform_3(%arg0: i32) -> (i32, i32) {
    %c0_i32 = arith.constant 0 : i32
    %c0_i32_0 = arith.constant 0 : i32
    %c0_i32_1 = arith.constant 0 : i32
    return %c0_i32, %c0_i32_0 : i32, i32
  }
  func.func @transform_4(%arg0: i32) -> (i32, i32) {
    %c0_i32 = arith.constant 0 : i32
    %c0_i32_0 = arith.constant 0 : i32
    return %arg0, %c0_i32 : i32, i32
  }
}

</mosaic_0001>

<llo_original>
// kernel: tpu_custom_call.1
$region0: #{tpu_custom_call.1}
  #allocation0 [shape = 'u32[]', space=smem, size = 0x4, offset = 0x4, fixed_abs, tag = 'smem constant byte address 0x4 - core index']
  #allocation1 [shape = 'u32[144,128]{1,0:T(1,128)}', space=vmem, size = 0x12000, scoped, tag = 'internal scratch']
  %s0 = inlined_call_operand.vmem [shape: bf16[64,512], index: 0, kind: input, shape index: {}]
  %s1 = inlined_call_operand.hbm [shape: bf16[512,512], index: 1, kind: input, shape index: {}]
  %s2 = inlined_call_operand.vmem [shape: bf16[512,4], index: 2, kind: input, shape index: {}]
  %s3 = inlined_call_operand.vmem [shape: bf16[4,512], index: 3, kind: input, shape index: {}]
  %s4 = inlined_call_operand.hbm [shape: f32[8,512], index: 4, kind: output, shape index: {}]
  %s5 = sld [smem:[#allocation0]]
  $region30: #{tpu_custom_call.1} parent=0
    _
  %s7 = ssub.s32 1, %s5
  %s8 = scalar_select 0, %s7, %s5
  $region1: #{tpu_custom_call.1} parent=0
    #allocation2 [shape = 'u8[524288]{0}', space=vmem, size = 0x80000, scoped, tag = 'input window, operand 1, single buffered']
    #allocation3 [shape = 's32[1]{0}', space=sflag, size = 0x4, scoped, tag = 'scoped memory for tpu_custom_call.1']
    #allocation4 [shape = 's32[1]{0}', space=sflag, size = 0x4, scoped, tag = 'scoped memory for tpu_custom_call.1']
    #allocation5 [shape = 'u8[16384]{0}', space=vmem, size = 0x4000, scoped, tag = 'output window, operand 0, single buffered']
    %9 = vsyncpa [#allocation3], 0
    %10 = vsyncpa [#allocation4], 0
    // Predicated region
    $region2: #{tpu_custom_call.1} parent=1 // pred_check
      _
    $region3: #{tpu_custom_call.1} parent=1 // pred_check_branch
      %12 = sbr.rel (0) target = $region5
    $region4: #{tpu_custom_call.1} parent=1 // pred_region
      _
    $region5: #{tpu_custom_call.1} parent=1 // pred_fallthru
      _
    // Predicated region
    $region6: #{tpu_custom_call.1} parent=1 // pred_check
      _
    $region7: #{tpu_custom_call.1} parent=1 // pred_check_branch
      %14 = sbr.rel (0) target = $region9
    $region8: #{tpu_custom_call.1} parent=1 // pred_region
      %s16 = ssub.s32 16384, 16384
      %17 = vsyncadd [#allocation3], %s16
      %s18 = sshll.u32 [#allocation2], 4
      %s19 = int_to_ptr.vmem [resolvable:$true] %s18
      %24 = dma.hbm_to_vmem [thread:$0]  %s1, 16384, %s19, [#allocation3], 256, 256, 16
    $region9: #{tpu_custom_call.1} parent=1 // pred_fallthru
      _
    // Predicated region
    $region10: #{tpu_custom_call.1} parent=1 // pred_check
      _
    $region11: #{tpu_custom_call.1} parent=1 // pred_check_branch
      %26 = sbr.rel (0) target = $region13
    $region12: #{tpu_custom_call.1} parent=1 // pred_region
      _
    $region13: #{tpu_custom_call.1} parent=1 // pred_fallthru
      _
    // Predicated region
    $region14: #{tpu_custom_call.1} parent=1 // pred_check
      _
    $region15: #{tpu_custom_call.1} parent=1 // pred_check_branch
      %28 = sbr.rel (0) target = $region17
    $region16: #{tpu_custom_call.1} parent=1 // pred_region
      _
    $region17: #{tpu_custom_call.1} parent=1 // pred_fallthru
      _
    // Predicated region
    $region18: #{tpu_custom_call.1} parent=1 // pred_check
      _
    $region19: #{tpu_custom_call.1} parent=1 // pred_check_branch
      %30 = sbr.rel (0) target = $region21
    $region20: #{tpu_custom_call.1} parent=1 // pred_region
      %31 = dma.done [#allocation3], 16384
    $region21: #{tpu_custom_call.1} parent=1 // pred_fallthru
      _
    %v33 = vld [vmem:[%s0] sm:$0xff]
    %v34 = vld [vmem:[%s0 + $0x8] sm:$0xff]
    %v35 = vld [vmem:[%s0 + $0x10] sm:$0xff]
    %v36 = vld [vmem:[%s0 + $0x18] sm:$0xff]
    %v37 = vld [vmem:[%s0 + $0x20] sm:$0xff]
    %v38 = vld [vmem:[%s0 + $0x28] sm:$0xff]
    %v39 = vld [vmem:[%s0 + $0x30] sm:$0xff]
    %v40 = vld [vmem:[%s0 + $0x38] sm:$0xff]
    %v41 = vld [vmem:[%s0 + $0x40] sm:$0xff]
    %v42 = vld [vmem:[%s0 + $0x48] sm:$0xff]
    %v43 = vld [vmem:[%s0 + $0x50] sm:$0xff]
    %v44 = vld [vmem:[%s0 + $0x58] sm:$0xff]
    %v45 = vld [vmem:[%s0 + $0x60] sm:$0xff]
    %v46 = vld [vmem:[%s0 + $0x68] sm:$0xff]
    %v47 = vld [vmem:[%s0 + $0x70] sm:$0xff]
    %v48 = vld [vmem:[%s0 + $0x78] sm:$0xff]
    %v49 = vld [vmem:[#allocation2] sm:$0xff]
    %v50 = vld [vmem:[#allocation2 + $0x8] sm:$0xff]
    %v51 = vld [vmem:[#allocation2 + $0x10] sm:$0xff]
    %v52 = vld [vmem:[#allocation2 + $0x18] sm:$0xff]
    %v53 = vld [vmem:[#allocation2 + $0x20] sm:$0xff]
    %v54 = vld [vmem:[#allocation2 + $0x28] sm:$0xff]
    %v55 = vld [vmem:[#allocation2 + $0x30] sm:$0xff]
    %v56 = vld [vmem:[#allocation2 + $0x38] sm:$0xff]
    %v57 = vld [vmem:[#allocation2 + $0x40] sm:$0xff]
    %v58 = vld [vmem:[#allocation2 + $0x48] sm:$0xff]
    %v59 = vld [vmem:[#allocation2 + $0x50] sm:$0xff]
    %v60 = vld [vmem:[#allocation2 + $0x58] sm:$0xff]
    %v61 = vld [vmem:[#allocation2 + $0x60] sm:$0xff]
    %v62 = vld [vmem:[#allocation2 + $0x68] sm:$0xff]
    %v63 = vld [vmem:[#allocation2 + $0x70] sm:$0xff]
    %v64 = vld [vmem:[#allocation2 + $0x78] sm:$0xff]
    %v65 = vld [vmem:[#allocation2 + $0x80] sm:$0xff]
    %v66 = vld [vmem:[#allocation2 + $0x88] sm:$0xff]
    %v67 = vld [vmem:[#allocation2 + $0x90] sm:$0xff]
    %v68 = vld [vmem:[#allocation2 + $0x98] sm:$0xff]
    %v69 = vld [vmem:[#allocation2 + $0xa0] sm:$0xff]
    %v70 = vld [vmem:[#allocation2 + $0xa8] sm:$0xff]
    %v71 = vld [vmem:[#allocation2 + $0xb0] sm:$0xff]
    %v72 = vld [vmem:[#allocation2 + $0xb8] sm:$0xff]
    %v73 = vld [vmem:[#allocation2 + $0xc0] sm:$0xff]
    %v74 = vld [vmem:[#allocation2 + $0xc8] sm:$0xff]
    %v75 = vld [vmem:[#allocation2 + $0xd0] sm:$0xff]
    %v76 = vld [vmem:[#allocation2 + $0xd8] sm:$0xff]
    %v77 = vld [vmem:[#allocation2 + $0xe0] sm:$0xff]
    %v78 = vld [vmem:[#allocation2 + $0xe8] sm:$0xff]
    %v79 = vld [vmem:[#allocation2 + $0xf0] sm:$0xff]
    %v80 = vld [vmem:[#allocation2 + $0xf8] sm:$0xff]
    %v81 = vld [vmem:[#allocation2 + $0x100] sm:$0xff]
    %v82 = vld [vmem:[#allocation2 + $0x108] sm:$0xff]
    %v83 = vld [vmem:[#allocation2 + $0x110] sm:$0xff]
    %v84 = vld [vmem:[#allocation2 + $0x118] sm:$0xff]
    %v85 = vld [vmem:[#allocation2 + $0x120] sm:$0xff]
    %v86 = vld [vmem:[#allocation2 + $0x128] sm:$0xff]
    %v87 = vld [vmem:[#allocation2 + $0x130] sm:$0xff]
    %v88 = vld [vmem:[#allocation2 + $0x138] sm:$0xff]
    %v89 = vld [vmem:[#allocation2 + $0x140] sm:$0xff]
    %v90 = vld [vmem:[#allocation2 + $0x148] sm:$0xff]
    %v91 = vld [vmem:[#allocation2 + $0x150] sm:$0xff]
    %v92 = vld [vmem:[#allocation2 + $0x158] sm:$0xff]
    %v93 = vld [vmem:[#allocation2 + $0x160] sm:$0xff]
    %v94 = vld [vmem:[#allocation2 + $0x168] sm:$0xff]
    %v95 = vld [vmem:[#allocation2 + $0x170] sm:$0xff]
    %v96 = vld [vmem:[#allocation2 + $0x178] sm:$0xff]
    %v97 = vld [vmem:[#allocation2 + $0x180] sm:$0xff]
    %v98 = vld [vmem:[#allocation2 + $0x188] sm:$0xff]
    %v99 = vld [vmem:[#allocation2 + $0x190] sm:$0xff]
    %v100 = vld [vmem:[#allocation2 + $0x198] sm:$0xff]
    %v101 = vld [vmem:[#allocation2 + $0x1a0] sm:$0xff]
    %v102 = vld [vmem:[#allocation2 + $0x1a8] sm:$0xff]
    %v103 = vld [vmem:[#allocation2 + $0x1b0] sm:$0xff]
    %v104 = vld [vmem:[#allocation2 + $0x1b8] sm:$0xff]
    %v105 = vld [vmem:[#allocation2 + $0x1c0] sm:$0xff]
    %v106 = vld [vmem:[#allocation2 + $0x1c8] sm:$0xff]
    %v107 = vld [vmem:[#allocation2 + $0x1d0] sm:$0xff]
    %v108 = vld [vmem:[#allocation2 + $0x1d8] sm:$0xff]
    %v109 = vld [vmem:[#allocation2 + $0x1e0] sm:$0xff]
    %v110 = vld [vmem:[#allocation2 + $0x1e8] sm:$0xff]
    %v111 = vld [vmem:[#allocation2 + $0x1f0] sm:$0xff]
    %v112 = vld [vmem:[#allocation2 + $0x1f8] sm:$0xff]
    %v113 = vld [vmem:[#allocation2 + $0x200] sm:$0xff]
    %v114 = vld [vmem:[#allocation2 + $0x208] sm:$0xff]
    %v115 = vld [vmem:[#allocation2 + $0x210] sm:$0xff]
    %v116 = vld [vmem:[#allocation2 + $0x218] sm:$0xff]
    %v117 = vld [vmem:[#allocation2 + $0x220] sm:$0xff]
    %v118 = vld [vmem:[#allocation2 + $0x228] sm:$0xff]
    %v119 = vld [vmem:[#allocation2 + $0x230] sm:$0xff]
    %v120 = vld [vmem:[#allocation2 + $0x238] sm:$0xff]
    %v121 = vld [vmem:[#allocation2 + $0x240] sm:$0xff]
    %v122 = vld [vmem:[#allocation2 + $0x248] sm:$0xff]
    %v123 = vld [vmem:[#allocation2 + $0x250] sm:$0xff]
    %v124 = vld [vmem:[#allocation2 + $0x258] sm:$0xff]
    %v125 = vld [vmem:[#allocation2 + $0x260] sm:$0xff]
    %v126 = vld [vmem:[#allocation2 + $0x268] sm:$0xff]
    %v127 = vld [vmem:[#allocation2 + $0x270] sm:$0xff]
    %v128 = vld [vmem:[#allocation2 + $0x278] sm:$0xff]
    %v129 = vld [vmem:[#allocation2 + $0x280] sm:$0xff]
    %v130 = vld [vmem:[#allocation2 + $0x288] sm:$0xff]
    %v131 = vld [vmem:[#allocation2 + $0x290] sm:$0xff]
    %v132 = vld [vmem:[#allocation2 + $0x298] sm:$0xff]
    %v133 = vld [vmem:[#allocation2 + $0x2a0] sm:$0xff]
    %v134 = vld [vmem:[#allocation2 + $0x2a8] sm:$0xff]
    %v135 = vld [vmem:[#allocation2 + $0x2b0] sm:$0xff]
    %v136 = vld [vmem:[#allocation2 + $0x2b8] sm:$0xff]
    %v137 = vld [vmem:[#allocation2 + $0x2c0] sm:$0xff]
    %v138 = vld [vmem:[#allocation2 + $0x2c8] sm:$0xff]
    %v139 = vld [vmem:[#allocation2 + $0x2d0] sm:$0xff]
    %v140 = vld [vmem:[#allocation2 + $0x2d8] sm:$0xff]
    %v141 = vld [vmem:[#allocation2 + $0x2e0] sm:$0xff]
    %v142 = vld [vmem:[#allocation2 + $0x2e8] sm:$0xff]
    %v143 = vld [vmem:[#allocation2 + $0x2f0] sm:$0xff]
    %v144 = vld [vmem:[#allocation2 + $0x2f8] sm:$0xff]
    %v145 = vld [vmem:[#allocation2 + $0x300] sm:$0xff]
    %v146 = vld [vmem:[#allocation2 + $0x308] sm:$0xff]
    %v147 = vld [vmem:[#allocation2 + $0x310] sm:$0xff]
    %v148 = vld [vmem:[#allocation2 + $0x318] sm:$0xff]
    %v149 = vld [vmem:[#allocation2 + $0x320] sm:$0xff]
    %v150 = vld [vmem:[#allocation2 + $0x328] sm:$0xff]
    %v151 = vld [vmem:[#allocation2 + $0x330] sm:$0xff]
    %v152 = vld [vmem:[#allocation2 + $0x338] sm:$0xff]
    %v153 = vld [vmem:[#allocation2 + $0x340] sm:$0xff]
    %v154 = vld [vmem:[#allocation2 + $0x348] sm:$0xff]
    %v155 = vld [vmem:[#allocation2 + $0x350] sm:$0xff]
    %v156 = vld [vmem:[#allocation2 + $0x358] sm:$0xff]
    %v157 = vld [vmem:[#allocation2 + $0x360] sm:$0xff]
    %v158 = vld [vmem:[#allocation2 + $0x368] sm:$0xff]
    %v159 = vld [vmem:[#allocation2 + $0x370] sm:$0xff]
    %v160 = vld [vmem:[#allocation2 + $0x378] sm:$0xff]
    %v161 = vld [vmem:[#allocation2 + $0x380] sm:$0xff]
    %v162 = vld [vmem:[#allocation2 + $0x388] sm:$0xff]
    %v163 = vld [vmem:[#allocation2 + $0x390] sm:$0xff]
    %v164 = vld [vmem:[#allocation2 + $0x398] sm:$0xff]
    %v165 = vld [vmem:[#allocation2 + $0x3a0] sm:$0xff]
    %v166 = vld [vmem:[#allocation2 + $0x3a8] sm:$0xff]
    %v167 = vld [vmem:[#allocation2 + $0x3b0] sm:$0xff]
    %v168 = vld [vmem:[#allocation2 + $0x3b8] sm:$0xff]
    %v169 = vld [vmem:[#allocation2 + $0x3c0] sm:$0xff]
    %v170 = vld [vmem:[#allocation2 + $0x3c8] sm:$0xff]
    %v171 = vld [vmem:[#allocation2 + $0x3d0] sm:$0xff]
    %v172 = vld [vmem:[#allocation2 + $0x3d8] sm:$0xff]
    %v173 = vld [vmem:[#allocation2 + $0x3e0] sm:$0xff]
    %v174 = vld [vmem:[#allocation2 + $0x3e8] sm:$0xff]
    %v175 = vld [vmem:[#allocation2 + $0x3f0] sm:$0xff]
    %v176 = vld [vmem:[#allocation2 + $0x3f8] sm:$0xff]
    %v193 = vunpack.c.l.b16 %v33
    %v194 = vunpack.c.h.b16 %v33
    %v195 = vunpack.c.l.b16 %v34
    %v196 = vunpack.c.h.b16 %v34
    %v197 = vunpack.c.l.b16 %v35
    %v198 = vunpack.c.h.b16 %v35
    %v199 = vunpack.c.l.b16 %v36
    %v200 = vunpack.c.h.b16 %v36
    %v201 = vunpack.c.l.b16 %v37
    %v202 = vunpack.c.h.b16 %v37
    %v203 = vunpack.c.l.b16 %v38
    %v204 = vunpack.c.h.b16 %v38
    %v205 = vunpack.c.l.b16 %v39
    %v206 = vunpack.c.h.b16 %v39
    %v207 = vunpack.c.l.b16 %v40
    %v208 = vunpack.c.h.b16 %v40
    %v209 = vunpack.c.l.b16 %v41
    %v210 = vunpack.c.h.b16 %v41
    %v211 = vunpack.c.l.b16 %v42
    %v212 = vunpack.c.h.b16 %v42
    %v213 = vunpack.c.l.b16 %v43
    %v214 = vunpack.c.h.b16 %v43
    %v215 = vunpack.c.l.b16 %v44
    %v216 = vunpack.c.h.b16 %v44
    %v217 = vunpack.c.l.b16 %v45
    %v218 = vunpack.c.h.b16 %v45
    %v219 = vunpack.c.l.b16 %v46
    %v220 = vunpack.c.h.b16 %v46
    %v221 = vunpack.c.l.b16 %v47
    %v222 = vunpack.c.h.b16 %v47
    %v223 = vunpack.c.l.b16 %v48
    %v224 = vunpack.c.h.b16 %v48
    %v225 = vpack.c.b16 %v197, %v193
    %v226 = vpack.c.b16 %v198, %v194
    %v227 = vpack.c.b16 %v199, %v195
    %v228 = vpack.c.b16 %v200, %v196
    %v229 = vpack.c.b16 %v205, %v201
    %v230 = vpack.c.b16 %v206, %v202
    %v231 = vpack.c.b16 %v207, %v203
    %v232 = vpack.c.b16 %v208, %v204
    %v233 = vpack.c.b16 %v213, %v209
    %v234 = vpack.c.b16 %v214, %v210
    %v235 = vpack.c.b16 %v215, %v211
    %v236 = vpack.c.b16 %v216, %v212
    %v237 = vpack.c.b16 %v221, %v217
    %v238 = vpack.c.b16 %v222, %v218
    %v239 = vpack.c.b16 %v223, %v219
    %v240 = vpack.c.b16 %v224, %v220
    %v385 = vunpack.c.l.b16 %v49
    %v386 = vunpack.c.h.b16 %v49
    %v387 = vunpack.c.l.b16 %v50
    %v388 = vunpack.c.h.b16 %v50
    %v389 = vunpack.c.l.b16 %v51
    %v390 = vunpack.c.h.b16 %v51
    %v391 = vunpack.c.l.b16 %v52
    %v392 = vunpack.c.h.b16 %v52
    %v393 = vunpack.c.l.b16 %v53
    %v394 = vunpack.c.h.b16 %v53
    %v395 = vunpack.c.l.b16 %v54
    %v396 = vunpack.c.h.b16 %v54
    %v397 = vunpack.c.l.b16 %v55
    %v398 = vunpack.c.h.b16 %v55
    %v399 = vunpack.c.l.b16 %v56
    %v400 = vunpack.c.h.b16 %v56
    %v401 = vunpack.c.l.b16 %v57
    %v402 = vunpack.c.h.b16 %v57
    %v403 = vunpack.c.l.b16 %v58
    %v404 = vunpack.c.h.b16 %v58
    %v405 = vunpack.c.l.b16 %v59
    %v406 = vunpack.c.h.b16 %v59
    %v407 = vunpack.c.l.b16 %v60
    %v408 = vunpack.c.h.b16 %v60
    %v409 = vunpack.c.l.b16 %v61
    %v410 = vunpack.c.h.b16 %v61
    %v411 = vunpack.c.l.b16 %v62
    %v412 = vunpack.c.h.b16 %v62
    %v413 = vunpack.c.l.b16 %v63
    %v414 = vunpack.c.h.b16 %v63
    %v415 = vunpack.c.l.b16 %v64
    %v416 = vunpack.c.h.b16 %v64
    %v417 = vunpack.c.l.b16 %v65
    %v418 = vunpack.c.h.b16 %v65
    %v419 = vunpack.c.l.b16 %v66
    %v420 = vunpack.c.h.b16 %v66
    %v421 = vunpack.c.l.b16 %v67
    %v422 = vunpack.c.h.b16 %v67
    %v423 = vunpack.c.l.b16 %v68
    %v424 = vunpack.c.h.b16 %v68
    %v425 = vunpack.c.l.b16 %v69
    %v426 = vunpack.c.h.b16 %v69
    %v427 = vunpack.c.l.b16 %v70
    %v428 = vunpack.c.h.b16 %v70
    %v429 = vunpack.c.l.b16 %v71
    %v430 = vunpack.c.h.b16 %v71
    %v431 = vunpack.c.l.b16 %v72
    %v432 = vunpack.c.h.b16 %v72
    %v433 = vunpack.c.l.b16 %v73
    %v434 = vunpack.c.h.b16 %v73
    %v435 = vunpack.c.l.b16 %v74
    %v436 = vunpack.c.h.b16 %v74
    %v437 = vunpack.c.l.b16 %v75
    %v438 = vunpack.c.h.b16 %v75
    %v439 = vunpack.c.l.b16 %v76
    %v440 = vunpack.c.h.b16 %v76
    %v441 = vunpack.c.l.b16 %v77
    %v442 = vunpack.c.h.b16 %v77
    %v443 = vunpack.c.l.b16 %v78
    %v444 = vunpack.c.h.b16 %v78
    %v445 = vunpack.c.l.b16 %v79
    %v446 = vunpack.c.h.b16 %v79
    %v447 = vunpack.c.l.b16 %v80
    %v448 = vunpack.c.h.b16 %v80
    %v449 = vunpack.c.l.b16 %v81
    %v450 = vunpack.c.h.b16 %v81
    %v451 = vunpack.c.l.b16 %v82
    %v452 = vunpack.c.h.b16 %v82
    %v453 = vunpack.c.l.b16 %v83
    %v454 = vunpack.c.h.b16 %v83
    %v455 = vunpack.c.l.b16 %v84
    %v456 = vunpack.c.h.b16 %v84
    %v457 = vunpack.c.l.b16 %v85
    %v458 = vunpack.c.h.b16 %v85
    %v459 = vunpack.c.l.b16 %v86
    %v460 = vunpack.c.h.b16 %v86
    %v461 = vunpack.c.l.b16 %v87
    %v462 = vunpack.c.h.b16 %v87
    %v463 = vunpack.c.l.b16 %v88
    %v464 = vunpack.c.h.b16 %v88
    %v465 = vunpack.c.l.b16 %v89
    %v466 = vunpack.c.h.b16 %v89
    %v467 = vunpack.c.l.b16 %v90
    %v468 = vunpack.c.h.b16 %v90
    %v469 = vunpack.c.l.b16 %v91
    %v470 = vunpack.c.h.b16 %v91
    %v471 = vunpack.c.l.b16 %v92
    %v472 = vunpack.c.h.b16 %v92
    %v473 = vunpack.c.l.b16 %v93
    %v474 = vunpack.c.h.b16 %v93
    %v475 = vunpack.c.l.b16 %v94
    %v476 = vunpack.c.h.b16 %v94
    %v477 = vunpack.c.l.b16 %v95
    %v478 = vunpack.c.h.b16 %v95
    %v479 = vunpack.c.l.b16 %v96
    %v480 = vunpack.c.h.b16 %v96
    %v481 = vunpack.c.l.b16 %v97
    %v482 = vunpack.c.h.b16 %v97
    %v483 = vunpack.c.l.b16 %v98
    %v484 = vunpack.c.h.b16 %v98
    %v485 = vunpack.c.l.b16 %v99
    %v486 = vunpack.c.h.b16 %v99
    %v487 = vunpack.c.l.b16 %v100
    %v488 = vunpack.c.h.b16 %v100
    %v489 = vunpack.c.l.b16 %v101
    %v490 = vunpack.c.h.b16 %v101
    %v491 = vunpack.c.l.b16 %v102
    %v492 = vunpack.c.h.b16 %v102
    %v493 = vunpack.c.l.b16 %v103
    %v494 = vunpack.c.h.b16 %v103
    %v495 = vunpack.c.l.b16 %v104
    %v496 = vunpack.c.h.b16 %v104
    %v497 = vunpack.c.l.b16 %v105
    %v498 = vunpack.c.h.b16 %v105
    %v499 = vunpack.c.l.b16 %v106
    %v500 = vunpack.c.h.b16 %v106
    %v501 = vunpack.c.l.b16 %v107
    %v502 = vunpack.c.h.b16 %v107
    %v503 = vunpack.c.l.b16 %v108
    %v504 = vunpack.c.h.b16 %v108
    %v505 = vunpack.c.l.b16 %v109
    %v506 = vunpack.c.h.b16 %v109
    %v507 = vunpack.c.l.b16 %v110
    %v508 = vunpack.c.h.b16 %v110
    %v509 = vunpack.c.l.b16 %v111
    %v510 = vunpack.c.h.b16 %v111
    %v511 = vunpack.c.l.b16 %v112
    %v512 = vunpack.c.h.b16 %v112
    %v513 = vunpack.c.l.b16 %v113
    %v514 = vunpack.c.h.b16 %v113
    %v515 = vunpack.c.l.b16 %v114
    %v516 = vunpack.c.h.b16 %v114
    %v517 = vunpack.c.l.b16 %v115
    %v518 = vunpack.c.h.b16 %v115
    %v519 = vunpack.c.l.b16 %v116
    %v520 = vunpack.c.h.b16 %v116
    %v521 = vunpack.c.l.b16 %v117
    %v522 = vunpack.c.h.b16 %v117
    %v523 = vunpack.c.l.b16 %v118
    %v524 = vunpack.c.h.b16 %v118
    %v525 = vunpack.c.l.b16 %v119
    %v526 = vunpack.c.h.b16 %v119
    %v527 = vunpack.c.l.b16 %v120
    %v528 = vunpack.c.h.b16 %v120
    %v529 = vunpack.c.l.b16 %v121
    %v530 = vunpack.c.h.b16 %v121
    %v531 = vunpack.c.l.b16 %v122
    %v532 = vunpack.c.h.b16 %v122
    %v533 = vunpack.c.l.b16 %v123
    %v534 = vunpack.c.h.b16 %v123
    %v535 = vunpack.c.l.b16 %v124
    %v536 = vunpack.c.h.b16 %v124
    %v537 = vunpack.c.l.b16 %v125
    %v538 = vunpack.c.h.b16 %v125
    %v539 = vunpack.c.l.b16 %v126
    %v540 = vunpack.c.h.b16 %v126
    %v541 = vunpack.c.l.b16 %v127
    %v542 = vunpack.c.h.b16 %v127
    %v543 = vunpack.c.l.b16 %v128
    %v544 = vunpack.c.h.b16 %v128
    %v545 = vunpack.c.l.b16 %v129
    %v546 = vunpack.c.h.b16 %v129
    %v547 = vunpack.c.l.b16 %v130
    %v548 = vunpack.c.h.b16 %v130
    %v549 = vunpack.c.l.b16 %v131
    %v550 = vunpack.c.h.b16 %v131
    %v551 = vunpack.c.l.b16 %v132
    %v552 = vunpack.c.h.b16 %v132
    %v553 = vunpack.c.l.b16 %v133
    %v554 = vunpack.c.h.b16 %v133
    %v555 = vunpack.c.l.b16 %v134
    %v556 = vunpack.c.h.b16 %v134
    %v557 = vunpack.c.l.b16 %v135
    %v558 = vunpack.c.h.b16 %v135
    %v559 = vunpack.c.l.b16 %v136
    %v560 = vunpack.c.h.b16 %v136
    %v561 = vunpack.c.l.b16 %v137
    %v562 = vunpack.c.h.b16 %v137
    %v563 = vunpack.c.l.b16 %v138
    %v564 = vunpack.c.h.b16 %v138
    %v565 = vunpack.c.l.b16 %v139
    %v566 = vunpack.c.h.b16 %v139
    %v567 = vunpack.c.l.b16 %v140
    %v568 = vunpack.c.h.b16 %v140
    %v569 = vunpack.c.l.b16 %v141
    %v570 = vunpack.c.h.b16 %v141
    %v571 = vunpack.c.l.b16 %v142
    %v572 = vunpack.c.h.b16 %v142
    %v573 = vunpack.c.l.b16 %v143
    %v574 = vunpack.c.h.b16 %v143
    %v575 = vunpack.c.l.b16 %v144
    %v576 = vunpack.c.h.b16 %v144
    %v577 = vunpack.c.l.b16 %v145
    %v578 = vunpack.c.h.b16 %v145
    %v579 = vunpack.c.l.b16 %v146
    %v580 = vunpack.c.h.b16 %v146
    %v581 = vunpack.c.l.b16 %v147
    %v582 = vunpack.c.h.b16 %v147
    %v583 = vunpack.c.l.b16 %v148
    %v584 = vunpack.c.h.b16 %v148
    %v585 = vunpack.c.l.b16 %v149
    %v586 = vunpack.c.h.b16 %v149
    %v587 = vunpack.c.l.b16 %v150
    %v588 = vunpack.c.h.b16 %v150
    %v589 = vunpack.c.l.b16 %v151
    %v590 = vunpack.c.h.b16 %v151
    %v591 = vunpack.c.l.b16 %v152
    %v592 = vunpack.c.h.b16 %v152
    %v593 = vunpack.c.l.b16 %v153
    %v594 = vunpack.c.h.b16 %v153
    %v595 = vunpack.c.l.b16 %v154
    %v596 = vunpack.c.h.b16 %v154
    %v597 = vunpack.c.l.b16 %v155
    %v598 = vunpack.c.h.b16 %v155
    %v599 = vunpack.c.l.b16 %v156
    %v600 = vunpack.c.h.b16 %v156
    %v601 = vunpack.c.l.b16 %v157
    %v602 = vunpack.c.h.b16 %v157
    %v603 = vunpack.c.l.b16 %v158
    %v604 = vunpack.c.h.b16 %v158
    %v605 = vunpack.c.l.b16 %v159
    %v606 = vunpack.c.h.b16 %v159
    %v607 = vunpack.c.l.b16 %v160
    %v608 = vunpack.c.h.b16 %v160
    %v609 = vunpack.c.l.b16 %v161
    %v610 = vunpack.c.h.b16 %v161
    %v611 = vunpack.c.l.b16 %v162
    %v612 = vunpack.c.h.b16 %v162
    %v613 = vunpack.c.l.b16 %v163
    %v614 = vunpack.c.h.b16 %v163
    %v615 = vunpack.c.l.b16 %v164
    %v616 = vunpack.c.h.b16 %v164
    %v617 = vunpack.c.l.b16 %v165
    %v618 = vunpack.c.h.b16 %v165
    %v619 = vunpack.c.l.b16 %v166
    %v620 = vunpack.c.h.b16 %v166
    %v621 = vunpack.c.l.b16 %v167
    %v622 = vunpack.c.h.b16 %v167
    %v623 = vunpack.c.l.b16 %v168
    %v624 = vunpack.c.h.b16 %v168
    %v625 = vunpack.c.l.b16 %v169
    %v626 = vunpack.c.h.b16 %v169
    %v627 = vunpack.c.l.b16 %v170
    %v628 = vunpack.c.h.b16 %v170
    %v629 = vunpack.c.l.b16 %v171
    %v630 = vunpack.c.h.b16 %v171
    %v631 = vunpack.c.l.b16 %v172
    %v632 = vunpack.c.h.b16 %v172
    %v633 = vunpack.c.l.b16 %v173
    %v634 = vunpack.c.h.b16 %v173
    %v635 = vunpack.c.l.b16 %v174
    %v636 = vunpack.c.h.b16 %v174
    %v637 = vunpack.c.l.b16 %v175
    %v638 = vunpack.c.h.b16 %v175
    %v639 = vunpack.c.l.b16 %v176
    %v640 = vunpack.c.h.b16 %v176
    %v641 = vpack.c.b16 %v389, %v385
    %v642 = vpack.c.b16 %v390, %v386
    %v643 = vpack.c.b16 %v391, %v387
    %v644 = vpack.c.b16 %v392, %v388
    %v645 = vpack.c.b16 %v397, %v393
    %v646 = vpack.c.b16 %v398, %v394
    %v647 = vpack.c.b16 %v399, %v395
    %v648 = vpack.c.b16 %v400, %v396
    %v649 = vpack.c.b16 %v405, %v401
    %v650 = vpack.c.b16 %v406, %v402
    %v651 = vpack.c.b16 %v407, %v403
    %v652 = vpack.c.b16 %v408, %v404
    %v653 = vpack.c.b16 %v413, %v409
    %v654 = vpack.c.b16 %v414, %v410
    %v655 = vpack.c.b16 %v415, %v411
    %v656 = vpack.c.b16 %v416, %v412
    %v657 = vpack.c.b16 %v421, %v417
    %v658 = vpack.c.b16 %v422, %v418
    %v659 = vpack.c.b16 %v423, %v419
    %v660 = vpack.c.b16 %v424, %v420
    %v661 = vpack.c.b16 %v429, %v425
    %v662 = vpack.c.b16 %v430, %v426
    %v663 = vpack.c.b16 %v431, %v427
    %v664 = vpack.c.b16 %v432, %v428
    %v665 = vpack.c.b16 %v437, %v433
    %v666 = vpack.c.b16 %v438, %v434
    %v667 = vpack.c.b16 %v439, %v435
    %v668 = vpack.c.b16 %v440, %v436
    %v669 = vpack.c.b16 %v445, %v441
    %v670 = vpack.c.b16 %v446, %v442
    %v671 = vpack.c.b16 %v447, %v443
    %v672 = vpack.c.b16 %v448, %v444
    %v673 = vpack.c.b16 %v453, %v449
    %v674 = vpack.c.b16 %v454, %v450
    %v675 = vpack.c.b16 %v455, %v451
    %v676 = vpack.c.b16 %v456, %v452
    %v677 = vpack.c.b16 %v461, %v457
    %v678 = vpack.c.b16 %v462, %v458
    %v679 = vpack.c.b16 %v463, %v459
    %v680 = vpack.c.b16 %v464, %v460
    %v681 = vpack.c.b16 %v469, %v465
    %v682 = vpack.c.b16 %v470, %v466
    %v683 = vpack.c.b16 %v471, %v467
    %v684 = vpack.c.b16 %v472, %v468
    %v685 = vpack.c.b16 %v477, %v473
    %v686 = vpack.c.b16 %v478, %v474
    %v687 = vpack.c.b16 %v479, %v475
    %v688 = vpack.c.b16 %v480, %v476
    %v689 = vpack.c.b16 %v485, %v481
    %v690 = vpack.c.b16 %v486, %v482
    %v691 = vpack.c.b16 %v487, %v483
    %v692 = vpack.c.b16 %v488, %v484
    %v693 = vpack.c.b16 %v493, %v489
    %v694 = vpack.c.b16 %v494, %v490
    %v695 = vpack.c.b16 %v495, %v491
    %v696 = vpack.c.b16 %v496, %v492
    %v697 = vpack.c.b16 %v501, %v497
    %v698 = vpack.c.b16 %v502, %v498
    %v699 = vpack.c.b16 %v503, %v499
    %v700 = vpack.c.b16 %v504, %v500
    %v701 = vpack.c.b16 %v509, %v505
    %v702 = vpack.c.b16 %v510, %v506
    %v703 = vpack.c.b16 %v511, %v507
    %v704 = vpack.c.b16 %v512, %v508
    %v705 = vpack.c.b16 %v517, %v513
    %v706 = vpack.c.b16 %v518, %v514
    %v707 = vpack.c.b16 %v519, %v515
    %v708 = vpack.c.b16 %v520, %v516
    %v709 = vpack.c.b16 %v525, %v521
    %v710 = vpack.c.b16 %v526, %v522
    %v711 = vpack.c.b16 %v527, %v523
    %v712 = vpack.c.b16 %v528, %v524
    %v713 = vpack.c.b16 %v533, %v529
    %v714 = vpack.c.b16 %v534, %v530
    %v715 = vpack.c.b16 %v535, %v531
    %v716 = vpack.c.b16 %v536, %v532
    %v717 = vpack.c.b16 %v541, %v537
    %v718 = vpack.c.b16 %v542, %v538
    %v719 = vpack.c.b16 %v543, %v539
    %v720 = vpack.c.b16 %v544, %v540
    %v721 = vpack.c.b16 %v549, %v545
    %v722 = vpack.c.b16 %v550, %v546
    %v723 = vpack.c.b16 %v551, %v547
    %v724 = vpack.c.b16 %v552, %v548
    %v725 = vpack.c.b16 %v557, %v553
    %v726 = vpack.c.b16 %v558, %v554
    %v727 = vpack.c.b16 %v559, %v555
    %v728 = vpack.c.b16 %v560, %v556
    %v729 = vpack.c.b16 %v565, %v561
    %v730 = vpack.c.b16 %v566, %v562
    %v731 = vpack.c.b16 %v567, %v563
    %v732 = vpack.c.b16 %v568, %v564
    %v733 = vpack.c.b16 %v573, %v569
    %v734 = vpack.c.b16 %v574, %v570
    %v735 = vpack.c.b16 %v575, %v571
    %v736 = vpack.c.b16 %v576, %v572
    %v737 = vpack.c.b16 %v581, %v577
    %v738 = vpack.c.b16 %v582, %v578
    %v739 = vpack.c.b16 %v583, %v579
    %v740 = vpack.c.b16 %v584, %v580
    %v741 = vpack.c.b16 %v589, %v585
    %v742 = vpack.c.b16 %v590, %v586
    %v743 = vpack.c.b16 %v591, %v587
    %v744 = vpack.c.b16 %v592, %v588
    %v745 = vpack.c.b16 %v597, %v593
    %v746 = vpack.c.b16 %v598, %v594
    %v747 = vpack.c.b16 %v599, %v595
    %v748 = vpack.c.b16 %v600, %v596
    %v749 = vpack.c.b16 %v605, %v601
    %v750 = vpack.c.b16 %v606, %v602
    %v751 = vpack.c.b16 %v607, %v603
    %v752 = vpack.c.b16 %v608, %v604
    %v753 = vpack.c.b16 %v613, %v609
    %v754 = vpack.c.b16 %v614, %v610
    %v755 = vpack.c.b16 %v615, %v611
    %v756 = vpack.c.b16 %v616, %v612
    %v757 = vpack.c.b16 %v621, %v617
    %v758 = vpack.c.b16 %v622, %v618
    %v759 = vpack.c.b16 %v623, %v619
    %v760 = vpack.c.b16 %v624, %v620
    %v761 = vpack.c.b16 %v629, %v625
    %v762 = vpack.c.b16 %v630, %v626
    %v763 = vpack.c.b16 %v631, %v627
    %v764 = vpack.c.b16 %v632, %v628
    %v765 = vpack.c.b16 %v637, %v633
    %v766 = vpack.c.b16 %v638, %v634
    %v767 = vpack.c.b16 %v639, %v635
    %v768 = vpack.c.b16 %v640, %v636
    %897 = vmatprep.subr.bf16.mxu0 %v642
    %898 = vmatpush1.bf16.msra.mxu0 %v641
    %899 = vmatprep.subr.bf16.mxu0 %v646
    %900 = vmatpush1.bf16.msra.mxu0 %v645
    %901 = vmatprep.subr.bf16.mxu0 %v650
    %902 = vmatpush1.bf16.msra.mxu0 %v649
    %903 = vmatprep.subr.bf16.mxu0 %v654
    %904 = vmatpush1.bf16.msra.mxu0 %v653
    %905 = vmatprep.subr.bf16.mxu0 %v658
    %906 = vmatpush1.bf16.msra.mxu0 %v657
    %907 = vmatprep.subr.bf16.mxu0 %v662
    %908 = vmatpush1.bf16.msra.mxu0 %v661
    %909 = vmatprep.subr.bf16.mxu0 %v666
    %910 = vmatpush1.bf16.msra.mxu0 %v665
    %911 = vmatprep.subr.bf16.mxu0 %v670
    %912 = vmatpush1.bf16.msra.mxu0 %v669
    %913 = vmatprep.subr.bf16.mxu0 %v674
    %914 = vmatpush1.bf16.msra.mxu0 %v673
    %915 = vmatprep.subr.bf16.mxu0 %v678
    %916 = vmatpush1.bf16.msra.mxu0 %v677
    %917 = vmatprep.subr.bf16.mxu0 %v682
    %918 = vmatpush1.bf16.msra.mxu0 %v681
    %919 = vmatprep.subr.bf16.mxu0 %v686
    %920 = vmatpush1.bf16.msra.mxu0 %v685
    %921 = vmatprep.subr.bf16.mxu0 %v690
    %922 = vmatpush1.bf16.msra.mxu0 %v689
    %923 = vmatprep.subr.bf16.mxu0 %v694
    %924 = vmatpush1.bf16.msra.mxu0 %v693
    %925 = vmatprep.subr.bf16.mxu0 %v698
    %926 = vmatpush1.bf16.msra.mxu0 %v697
    %927 = vmatprep.subr.bf16.mxu0 %v702
    %928 = vmatpush1.bf16.msra.mxu0 %v701
    %929 = vmatprep.mubr.bf16.mxu0 %v226
    %930 = vmatmul.mubr.bf16.gmra.mrb[0].mxu0 %v225
    %v931 = vpop.f32.mrb[0].mxu0
    %v932 = vadd.f32 0.0, %v931
    %v933 = vpop.f32.mrb[0].mxu0
    %v934 = vadd.f32 0.0, %v933
    %v935 = vpop.f32.mrb[0].mxu0
    %v936 = vadd.f32 0.0, %v935
    %v937 = vpop.f32.mrb[0].mxu0
    %v938 = vadd.f32 0.0, %v937
    %939 = vmatprep.mubr.bf16.mxu0 %v230
    %940 = vmatmul.mubr.bf16.gmra.mrb[0].mxu0 %v229
    %v941 = vpop.f32.mrb[0].mxu0
    %v942 = vadd.f32 0.0, %v941
    %v943 = vpop.f32.mrb[0].mxu0
    %v944 = vadd.f32 0.0, %v943
    %v945 = vpop.f32.mrb[0].mxu0
    %v946 = vadd.f32 0.0, %v945
    %v947 = vpop.f32.mrb[0].mxu0
    %v948 = vadd.f32 0.0, %v947
    %949 = vmatprep.mubr.bf16.mxu0 %v234
    %950 = vmatmul.mubr.bf16.gmra.mrb[0].mxu0 %v233
    %v951 = vpop.f32.mrb[0].mxu0
    %v952 = vadd.f32 0.0, %v951
    %v953 = vpop.f32.mrb[0].mxu0
    %v954 = vadd.f32 0.0, %v953
    %v955 = vpop.f32.mrb[0].mxu0
    %v956 = vadd.f32 0.0, %v955
    %v957 = vpop.f32.mrb[0].mxu0
    %v958 = vadd.f32 0.0, %v957
    %959 = vmatprep.mubr.bf16.mxu0 %v238
    %960 = vmatmul.mubr.bf16.gmra.mrb[0].mxu0 %v237
    %v961 = vpop.f32.mrb[0].mxu0
    %v962 = vadd.f32 0.0, %v961
    %v963 = vpop.f32.mrb[0].mxu0
    %v964 = vadd.f32 0.0, %v963
    %v965 = vpop.f32.mrb[0].mxu0
    %v966 = vadd.f32 0.0, %v965
    %v967 = vpop.f32.mrb[0].mxu0
    %v968 = vadd.f32 0.0, %v967
    %969 = vdwg.mxu0
    %970 = vmatprep.subr.bf16.mxu0 %v706
    %971 = vmatpush1.bf16.msra.mxu0 %v705
    %972 = vmatprep.subr.bf16.mxu0 %v710
    %973 = vmatpush1.bf16.msra.mxu0 %v709
    %974 = vmatprep.subr.bf16.mxu0 %v714
    %975 = vmatpush1.bf16.msra.mxu0 %v713
    %976 = vmatprep.subr.bf16.mxu0 %v718
    %977 = vmatpush1.bf16.msra.mxu0 %v717
    %978 = vmatprep.subr.bf16.mxu0 %v722
    %979 = vmatpush1.bf16.msra.mxu0 %v721
    %980 = vmatprep.subr.bf16.mxu0 %v726
    %981 = vmatpush1.bf16.msra.mxu0 %v725
    %982 = vmatprep.subr.bf16.mxu0 %v730
    %983 = vmatpush1.bf16.msra.mxu0 %v729
    %984 = vmatprep.subr.bf16.mxu0 %v734
    %985 = vmatpush1.bf16.msra.mxu0 %v733
    %986 = vmatprep.subr.bf16.mxu0 %v738
    %987 = vmatpush1.bf16.msra.mxu0 %v737
    %988 = vmatprep.subr.bf16.mxu0 %v742
    %989 = vmatpush1.bf16.msra.mxu0 %v741
    %990 = vmatprep.subr.bf16.mxu0 %v746
    %991 = vmatpush1.bf16.msra.mxu0 %v745
    %992 = vmatprep.subr.bf16.mxu0 %v750
    %993 = vmatpush1.bf16.msra.mxu0 %v749
    %994 = vmatprep.subr.bf16.mxu0 %v754
    %995 = vmatpush1.bf16.msra.mxu0 %v753
    %996 = vmatprep.subr.bf16.mxu0 %v758
    %997 = vmatpush1.bf16.msra.mxu0 %v757
    %998 = vmatprep.subr.bf16.mxu0 %v762
    %999 = vmatpush1.bf16.msra.mxu0 %v761
    %1000 = vmatprep.subr.bf16.mxu0 %v766
    %1001 = vmatpush1.bf16.msra.mxu0 %v765
    %1002 = vmatprep.mubr.bf16.mxu0 %v228
    %1003 = vmatmul.mubr.bf16.gmra.mrb[0].mxu0 %v227
    %v1004 = vpop.f32.mrb[0].mxu0
    %v1005 = vadd.f32 %v932, %v1004
    %v1006 = vpop.f32.mrb[0].mxu0
    %v1007 = vadd.f32 %v934, %v1006
    %v1008 = vpop.f32.mrb[0].mxu0
    %v1009 = vadd.f32 %v936, %v1008
    %v1010 = vpop.f32.mrb[0].mxu0
    %v1011 = vadd.f32 %v938, %v1010
    %1012 = vmatprep.mubr.bf16.mxu0 %v232
    %1013 = vmatmul.mubr.bf16.gmra.mrb[0].mxu0 %v231
    %v1014 = vpop.f32.mrb[0].mxu0
    %v1015 = vadd.f32 %v942, %v1014
    %v1016 = vpop.f32.mrb[0].mxu0
    %v1017 = vadd.f32 %v944, %v1016
    %v1018 = vpop.f32.mrb[0].mxu0
    %v1019 = vadd.f32 %v946, %v1018
    %v1020 = vpop.f32.mrb[0].mxu0
    %v1021 = vadd.f32 %v948, %v1020
    %1022 = vmatprep.mubr.bf16.mxu0 %v236
    %1023 = vmatmul.mubr.bf16.gmra.mrb[0].mxu0 %v235
    %v1024 = vpop.f32.mrb[0].mxu0
    %v1025 = vadd.f32 %v952, %v1024
    %v1026 = vpop.f32.mrb[0].mxu0
    %v1027 = vadd.f32 %v954, %v1026
    %v1028 = vpop.f32.mrb[0].mxu0
    %v1029 = vadd.f32 %v956, %v1028
    %v1030 = vpop.f32.mrb[0].mxu0
    %v1031 = vadd.f32 %v958, %v1030
    %1032 = vmatprep.mubr.bf16.mxu0 %v240
    %1033 = vmatmul.mubr.bf16.gmra.mrb[0].mxu0 %v239
    %v1034 = vpop.f32.mrb[0].mxu0
    %v1035 = vadd.f32 %v962, %v1034
    %v1036 = vpop.f32.mrb[0].mxu0
    %v1037 = vadd.f32 %v964, %v1036
    %v1038 = vpop.f32.mrb[0].mxu0
    %v1039 = vadd.f32 %v966, %v1038
    %v1040 = vpop.f32.mrb[0].mxu0
    %v1041 = vadd.f32 %v968, %v1040
    %1042 = vdwg.mxu0
    %1043 = vmatprep.subr.bf16.mxu0 %v644
    %1044 = vmatpush1.bf16.msra.mxu0 %v643
    %1045 = vmatprep.subr.bf16.mxu0 %v648
    %1046 = vmatpush1.bf16.msra.mxu0 %v647
    %1047 = vmatprep.subr.bf16.mxu0 %v652
    %1048 = vmatpush1.bf16.msra.mxu0 %v651
    %1049 = vmatprep.subr.bf16.mxu0 %v656
    %1050 = vmatpush1.bf16.msra.mxu0 %v655
    %1051 = vmatprep.subr.bf16.mxu0 %v660
    %1052 = vmatpush1.bf16.msra.mxu0 %v659
    %1053 = vmatprep.subr.bf16.mxu0 %v664
    %1054 = vmatpush1.bf16.msra.mxu0 %v663
    %1055 = vmatprep.subr.bf16.mxu0 %v668
    %1056 = vmatpush1.bf16.msra.mxu0 %v667
    %1057 = vmatprep.subr.bf16.mxu0 %v672
    %1058 = vmatpush1.bf16.msra.mxu0 %v671
    %1059 = vmatprep.subr.bf16.mxu0 %v676
    %1060 = vmatpush1.bf16.msra.mxu0 %v675
    %1061 = vmatprep.subr.bf16.mxu0 %v680
    %1062 = vmatpush1.bf16.msra.mxu0 %v679
    %1063 = vmatprep.subr.bf16.mxu0 %v684
    %1064 = vmatpush1.bf16.msra.mxu0 %v683
    %1065 = vmatprep.subr.bf16.mxu0 %v688
    %1066 = vmatpush1.bf16.msra.mxu0 %v687
    %1067 = vmatprep.subr.bf16.mxu0 %v692
    %1068 = vmatpush1.bf16.msra.mxu0 %v691
    %1069 = vmatprep.subr.bf16.mxu0 %v696
    %1070 = vmatpush1.bf16.msra.mxu0 %v695
    %1071 = vmatprep.subr.bf16.mxu0 %v700
    %1072 = vmatpush1.bf16.msra.mxu0 %v699
    %1073 = vmatprep.subr.bf16.mxu0 %v704
    %1074 = vmatpush1.bf16.msra.mxu0 %v703
    %1075 = vmatprep.mubr.bf16.mxu0 %v226
    %1076 = vmatmul.mubr.bf16.gmra.mrb[0].mxu0 %v225
    %v1077 = vpop.f32.mrb[0].mxu0
    %v1078 = vadd.f32 0.0, %v1077
    %v1079 = vpop.f32.mrb[0].mxu0
    %v1080 = vadd.f32 0.0, %v1079
    %v1081 = vpop.f32.mrb[0].mxu0
    %v1082 = vadd.f32 0.0, %v1081
    %v1083 = vpop.f32.mrb[0].mxu0
    %v1084 = vadd.f32 0.0, %v1083
    %1085 = vmatprep.mubr.bf16.mxu0 %v230
    %1086 = vmatmul.mubr.bf16.gmra.mrb[0].mxu0 %v229
    %v1087 = vpop.f32.mrb[0].mxu0
    %v1088 = vadd.f32 0.0, %v1087
    %v1089 = vpop.f32.mrb[0].mxu0
    %v1090 = vadd.f32 0.0, %v1089
    %v1091 = vpop.f32.mrb[0].mxu0
    %v1092 = vadd.f32 0.0, %v1091
    %v1093 = vpop.f32.mrb[0].mxu0
    %v1094 = vadd.f32 0.0, %v1093
    %1095 = vmatprep.mubr.bf16.mxu0 %v234
    %1096 = vmatmul.mubr.bf16.gmra.mrb[0].mxu0 %v233
    %v1097 = vpop.f32.mrb[0].mxu0
    %v1098 = vadd.f32 0.0, %v1097
    %v1099 = vpop.f32.mrb[0].mxu0
    %v1100 = vadd.f32 0.0, %v1099
    %v1101 = vpop.f32.mrb[0].mxu0
    %v1102 = vadd.f32 0.0, %v1101
    %v1103 = vpop.f32.mrb[0].mxu0
    %v1104 = vadd.f32 0.0, %v1103
    %1105 = vmatprep.mubr.bf16.mxu0 %v238
    %1106 = vmatmul.mubr.bf16.gmra.mrb[0].mxu0 %v237
    %v1107 = vpop.f32.mrb[0].mxu0
    %v1108 = vadd.f32 0.0, %v1107
    %v1109 = vpop.f32.mrb[0].mxu0
    %v1110 = vadd.f32 0.0, %v1109
    %v1111 = vpop.f32.mrb[0].mxu0
    %v1112 = vadd.f32 0.0, %v1111
    %v1113 = vpop.f32.mrb[0].mxu0
    %v1114 = vadd.f32 0.0, %v1113
    %1115 = vdwg.mxu0
    %1116 = vmatprep.subr.bf16.mxu0 %v708
    %1117 = vmatpush1.bf16.msra.mxu0 %v707
    %1118 = vmatprep.subr.bf16.mxu0 %v712
    %1119 = vmatpush1.bf16.msra.mxu0 %v711
    %1120 = vmatprep.subr.bf16.mxu0 %v716
    %1121 = vmatpush1.bf16.msra.mxu0 %v715
    %1122 = vmatprep.subr.bf16.mxu0 %v720
    %1123 = vmatpush1.bf16.msra.mxu0 %v719
    %1124 = vmatprep.subr.bf16.mxu0 %v724
    %1125 = vmatpush1.bf16.msra.mxu0 %v723
    %1126 = vmatprep.subr.bf16.mxu0 %v728
    %1127 = vmatpush1.bf16.msra.mxu0 %v727
    %1128 = vmatprep.subr.bf16.mxu0 %v732
    %1129 = vmatpush1.bf16.msra.mxu0 %v731
    %1130 = vmatprep.subr.bf16.mxu0 %v736
    %1131 = vmatpush1.bf16.msra.mxu0 %v735
    %1132 = vmatprep.subr.bf16.mxu0 %v740
    %1133 = vmatpush1.bf16.msra.mxu0 %v739
    %1134 = vmatprep.subr.bf16.mxu0 %v744
    %1135 = vmatpush1.bf16.msra.mxu0 %v743
    %1136 = vmatprep.subr.bf16.mxu0 %v748
    %1137 = vmatpush1.bf16.msra.mxu0 %v747
    %1138 = vmatprep.subr.bf16.mxu0 %v752
    %1139 = vmatpush1.bf16.msra.mxu0 %v751
    %1140 = vmatprep.subr.bf16.mxu0 %v756
    %1141 = vmatpush1.bf16.msra.mxu0 %v755
    %1142 = vmatprep.subr.bf16.mxu0 %v760
    %1143 = vmatpush1.bf16.msra.mxu0 %v759
    %1144 = vmatprep.subr.bf16.mxu0 %v764
    %1145 = vmatpush1.bf16.msra.mxu0 %v763
    %1146 = vmatprep.subr.bf16.mxu0 %v768
    %1147 = vmatpush1.bf16.msra.mxu0 %v767
    %1148 = vmatprep.mubr.bf16.mxu0 %v228
    %1149 = vmatmul.mubr.bf16.gmra.mrb[0].mxu0 %v227
    %v1150 = vpop.f32.mrb[0].mxu0
    %v1151 = vadd.f32 %v1078, %v1150
    %v1152 = vpop.f32.mrb[0].mxu0
    %v1153 = vadd.f32 %v1080, %v1152
    %v1154 = vpop.f32.mrb[0].mxu0
    %v1155 = vadd.f32 %v1082, %v1154
    %v1156 = vpop.f32.mrb[0].mxu0
    %v1157 = vadd.f32 %v1084, %v1156
    %1158 = vmatprep.mubr.bf16.mxu0 %v232
    %1159 = vmatmul.mubr.bf16.gmra.mrb[0].mxu0 %v231
    %v1160 = vpop.f32.mrb[0].mxu0
    %v1161 = vadd.f32 %v1088, %v1160
    %v1162 = vpop.f32.mrb[0].mxu0
    %v1163 = vadd.f32 %v1090, %v1162
    %v1164 = vpop.f32.mrb[0].mxu0
    %v1165 = vadd.f32 %v1092, %v1164
    %v1166 = vpop.f32.mrb[0].mxu0
    %v1167 = vadd.f32 %v1094, %v1166
    %1168 = vmatprep.mubr.bf16.mxu0 %v236
    %1169 = vmatmul.mubr.bf16.gmra.mrb[0].mxu0 %v235
    %v1170 = vpop.f32.mrb[0].mxu0
    %v1171 = vadd.f32 %v1098, %v1170
    %v1172 = vpop.f32.mrb[0].mxu0
    %v1173 = vadd.f32 %v1100, %v1172
    %v1174 = vpop.f32.mrb[0].mxu0
    %v1175 = vadd.f32 %v1102, %v1174
    %v1176 = vpop.f32.mrb[0].mxu0
    %v1177 = vadd.f32 %v1104, %v1176
    %1178 = vmatprep.mubr.bf16.mxu0 %v240
    %1179 = vmatmul.mubr.bf16.gmra.mrb[0].mxu0 %v239
    %v1180 = vpop.f32.mrb[0].mxu0
    %v1181 = vadd.f32 %v1108, %v1180
    %v1182 = vpop.f32.mrb[0].mxu0
    %v1183 = vadd.f32 %v1110, %v1182
    %v1184 = vpop.f32.mrb[0].mxu0
    %v1185 = vadd.f32 %v1112, %v1184
    %v1186 = vpop.f32.mrb[0].mxu0
    %v1187 = vadd.f32 %v1114, %v1186
    %1188 = vdwg.mxu0
    %v1189 = vpack.c.bf16 %v1009, %v1005
    %v1190 = vpack.c.bf16 %v1011, %v1007
    %v1191 = vpack.c.bf16 %v1155, %v1151
    %v1192 = vpack.c.bf16 %v1157, %v1153
    %v1193 = vpack.c.bf16 %v1019, %v1015
    %v1194 = vpack.c.bf16 %v1021, %v1017
    %v1195 = vpack.c.bf16 %v1165, %v1161
    %v1196 = vpack.c.bf16 %v1167, %v1163
    %v1197 = vpack.c.bf16 %v1029, %v1025
    %v1198 = vpack.c.bf16 %v1031, %v1027
    %v1199 = vpack.c.bf16 %v1175, %v1171
    %v1200 = vpack.c.bf16 %v1177, %v1173
    %v1201 = vpack.c.bf16 %v1039, %v1035
    %v1202 = vpack.c.bf16 %v1041, %v1037
    %v1203 = vpack.c.bf16 %v1185, %v1181
    %v1204 = vpack.c.bf16 %v1187, %v1183
    %v1205 = vld [vmem:[%s2] sm:$0xf]
    %v1206 = vld [vmem:[%s2 + $0x4] sm:$0xf]
    %v1207 = vld [vmem:[%s2 + $0x8] sm:$0xf]
    %v1208 = vld [vmem:[%s2 + $0xc] sm:$0xf]
    %v1209 = vld [vmem:[%s2 + $0x10] sm:$0xf]
    %v1210 = vld [vmem:[%s2 + $0x14] sm:$0xf]
    %v1211 = vld [vmem:[%s2 + $0x18] sm:$0xf]
    %v1212 = vld [vmem:[%s2 + $0x1c] sm:$0xf]
    %v1213 = vld [vmem:[%s2 + $0x20] sm:$0xf]
    %v1214 = vld [vmem:[%s2 + $0x24] sm:$0xf]
    %v1215 = vld [vmem:[%s2 + $0x28] sm:$0xf]
    %v1216 = vld [vmem:[%s2 + $0x2c] sm:$0xf]
    %v1217 = vld [vmem:[%s2 + $0x30] sm:$0xf]
    %v1218 = vld [vmem:[%s2 + $0x34] sm:$0xf]
    %v1219 = vld [vmem:[%s2 + $0x38] sm:$0xf]
    %v1220 = vld [vmem:[%s2 + $0x3c] sm:$0xf]
    %v1221 = vld [vmem:[%s2 + $0x40] sm:$0xf]
    %v1222 = vld [vmem:[%s2 + $0x44] sm:$0xf]
    %v1223 = vld [vmem:[%s2 + $0x48] sm:$0xf]
    %v1224 = vld [vmem:[%s2 + $0x4c] sm:$0xf]
    %v1225 = vld [vmem:[%s2 + $0x50] sm:$0xf]
    %v1226 = vld [vmem:[%s2 + $0x54] sm:$0xf]
    %v1227 = vld [vmem:[%s2 + $0x58] sm:$0xf]
    %v1228 = vld [vmem:[%s2 + $0x5c] sm:$0xf]
    %v1229 = vld [vmem:[%s2 + $0x60] sm:$0xf]
    %v1230 = vld [vmem:[%s2 + $0x64] sm:$0xf]
    %v1231 = vld [vmem:[%s2 + $0x68] sm:$0xf]
    %v1232 = vld [vmem:[%s2 + $0x6c] sm:$0xf]
    %v1233 = vld [vmem:[%s2 + $0x70] sm:$0xf]
    %v1234 = vld [vmem:[%s2 + $0x74] sm:$0xf]
    %v1235 = vld [vmem:[%s2 + $0x78] sm:$0xf]
    %v1236 = vld [vmem:[%s2 + $0x7c] sm:$0xf]
    %v1237 = vld [vmem:[%s2 + $0x80] sm:$0xf]
    %v1238 = vld [vmem:[%s2 + $0x84] sm:$0xf]
    %v1239 = vld [vmem:[%s2 + $0x88] sm:$0xf]
    %v1240 = vld [vmem:[%s2 + $0x8c] sm:$0xf]
    %v1241 = vld [vmem:[%s2 + $0x90] sm:$0xf]
    %v1242 = vld [vmem:[%s2 + $0x94] sm:$0xf]
    %v1243 = vld [vmem:[%s2 + $0x98] sm:$0xf]
    %v1244 = vld [vmem:[%s2 + $0x9c] sm:$0xf]
    %v1245 = vld [vmem:[%s2 + $0xa0] sm:$0xf]
    %v1246 = vld [vmem:[%s2 + $0xa4] sm:$0xf]
    %v1247 = vld [vmem:[%s2 + $0xa8] sm:$0xf]
    %v1248 = vld [vmem:[%s2 + $0xac] sm:$0xf]
    %v1249 = vld [vmem:[%s2 + $0xb0] sm:$0xf]
    %v1250 = vld [vmem:[%s2 + $0xb4] sm:$0xf]
    %v1251 = vld [vmem:[%s2 + $0xb8] sm:$0xf]
    %v1252 = vld [vmem:[%s2 + $0xbc] sm:$0xf]
    %v1253 = vld [vmem:[%s2 + $0xc0] sm:$0xf]
    %v1254 = vld [vmem:[%s2 + $0xc4] sm:$0xf]
    %v1255 = vld [vmem:[%s2 + $0xc8] sm:$0xf]
    %v1256 = vld [vmem:[%s2 + $0xcc] sm:$0xf]
    %v1257 = vld [vmem:[%s2 + $0xd0] sm:$0xf]
    %v1258 = vld [vmem:[%s2 + $0xd4] sm:$0xf]
    %v1259 = vld [vmem:[%s2 + $0xd8] sm:$0xf]
    %v1260 = vld [vmem:[%s2 + $0xdc] sm:$0xf]
    %v1261 = vld [vmem:[%s2 + $0xe0] sm:$0xf]
    %v1262 = vld [vmem:[%s2 + $0xe4] sm:$0xf]
    %v1263 = vld [vmem:[%s2 + $0xe8] sm:$0xf]
    %v1264 = vld [vmem:[%s2 + $0xec] sm:$0xf]
    %v1265 = vld [vmem:[%s2 + $0xf0] sm:$0xf]
    %v1266 = vld [vmem:[%s2 + $0xf4] sm:$0xf]
    %v1267 = vld [vmem:[%s2 + $0xf8] sm:$0xf]
    %v1268 = vld [vmem:[%s2 + $0xfc] sm:$0xf]
    %v1333 = vunpack.c.l.b16 %v1205
    %v1334 = vunpack.c.l.b16 %v1206
    %v1335 = vunpack.c.l.b16 %v1207
    %v1336 = vunpack.c.l.b16 %v1208
    %v1337 = vunpack.c.l.b16 %v1209
    %v1338 = vunpack.c.l.b16 %v1210
    %v1339 = vunpack.c.l.b16 %v1211
    %v1340 = vunpack.c.l.b16 %v1212
    %v1341 = vunpack.c.l.b16 %v1213
    %v1342 = vunpack.c.l.b16 %v1214
    %v1343 = vunpack.c.l.b16 %v1215
    %v1344 = vunpack.c.l.b16 %v1216
    %v1345 = vunpack.c.l.b16 %v1217
    %v1346 = vunpack.c.l.b16 %v1218
    %v1347 = vunpack.c.l.b16 %v1219
    %v1348 = vunpack.c.l.b16 %v1220
    %v1349 = vunpack.c.l.b16 %v1221
    %v1350 = vunpack.c.l.b16 %v1222
    %v1351 = vunpack.c.l.b16 %v1223
    %v1352 = vunpack.c.l.b16 %v1224
    %v1353 = vunpack.c.l.b16 %v1225
    %v1354 = vunpack.c.l.b16 %v1226
    %v1355 = vunpack.c.l.b16 %v1227
    %v1356 = vunpack.c.l.b16 %v1228
    %v1357 = vunpack.c.l.b16 %v1229
    %v1358 = vunpack.c.l.b16 %v1230
    %v1359 = vunpack.c.l.b16 %v1231
    %v1360 = vunpack.c.l.b16 %v1232
    %v1361 = vunpack.c.l.b16 %v1233
    %v1362 = vunpack.c.l.b16 %v1234
    %v1363 = vunpack.c.l.b16 %v1235
    %v1364 = vunpack.c.l.b16 %v1236
    %v1365 = vunpack.c.l.b16 %v1237
    %v1366 = vunpack.c.l.b16 %v1238
    %v1367 = vunpack.c.l.b16 %v1239
    %v1368 = vunpack.c.l.b16 %v1240
    %v1369 = vunpack.c.l.b16 %v1241
    %v1370 = vunpack.c.l.b16 %v1242
    %v1371 = vunpack.c.l.b16 %v1243
    %v1372 = vunpack.c.l.b16 %v1244
    %v1373 = vunpack.c.l.b16 %v1245
    %v1374 = vunpack.c.l.b16 %v1246
    %v1375 = vunpack.c.l.b16 %v1247
    %v1376 = vunpack.c.l.b16 %v1248
    %v1377 = vunpack.c.l.b16 %v1249
    %v1378 = vunpack.c.l.b16 %v1250
    %v1379 = vunpack.c.l.b16 %v1251
    %v1380 = vunpack.c.l.b16 %v1252
    %v1381 = vunpack.c.l.b16 %v1253
    %v1382 = vunpack.c.l.b16 %v1254
    %v1383 = vunpack.c.l.b16 %v1255
    %v1384 = vunpack.c.l.b16 %v1256
    %v1385 = vunpack.c.l.b16 %v1257
    %v1386 = vunpack.c.l.b16 %v1258
    %v1387 = vunpack.c.l.b16 %v1259
    %v1388 = vunpack.c.l.b16 %v1260
    %v1389 = vunpack.c.l.b16 %v1261
    %v1390 = vunpack.c.l.b16 %v1262
    %v1391 = vunpack.c.l.b16 %v1263
    %v1392 = vunpack.c.l.b16 %v1264
    %v1393 = vunpack.c.l.b16 %v1265
    %v1394 = vunpack.c.l.b16 %v1266
    %v1395 = vunpack.c.l.b16 %v1267
    %v1396 = vunpack.c.l.b16 %v1268
    %v1397 = vpack.c.b16 %v1334, %v1333
    %v1398 = vpack.c.b16 %v1336, %v1335
    %v1399 = vpack.c.b16 %v1338, %v1337
    %v1400 = vpack.c.b16 %v1340, %v1339
    %v1401 = vpack.c.b16 %v1342, %v1341
    %v1402 = vpack.c.b16 %v1344, %v1343
    %v1403 = vpack.c.b16 %v1346, %v1345
    %v1404 = vpack.c.b16 %v1348, %v1347
    %v1405 = vpack.c.b16 %v1350, %v1349
    %v1406 = vpack.c.b16 %v1352, %v1351
    %v1407 = vpack.c.b16 %v1354, %v1353
    %v1408 = vpack.c.b16 %v1356, %v1355
    %v1409 = vpack.c.b16 %v1358, %v1357
    %v1410 = vpack.c.b16 %v1360, %v1359
    %v1411 = vpack.c.b16 %v1362, %v1361
    %v1412 = vpack.c.b16 %v1364, %v1363
    %v1413 = vpack.c.b16 %v1366, %v1365
    %v1414 = vpack.c.b16 %v1368, %v1367
    %v1415 = vpack.c.b16 %v1370, %v1369
    %v1416 = vpack.c.b16 %v1372, %v1371
    %v1417 = vpack.c.b16 %v1374, %v1373
    %v1418 = vpack.c.b16 %v1376, %v1375
    %v1419 = vpack.c.b16 %v1378, %v1377
    %v1420 = vpack.c.b16 %v1380, %v1379
    %v1421 = vpack.c.b16 %v1382, %v1381
    %v1422 = vpack.c.b16 %v1384, %v1383
    %v1423 = vpack.c.b16 %v1386, %v1385
    %v1424 = vpack.c.b16 %v1388, %v1387
    %v1425 = vpack.c.b16 %v1390, %v1389
    %v1426 = vpack.c.b16 %v1392, %v1391
    %v1427 = vpack.c.b16 %v1394, %v1393
    %v1428 = vpack.c.b16 %v1396, %v1395
    %1461 = vmatprep.subr.bf16.mxu0 0
    %1462 = vmatpush1.bf16.msra.mxu0 %v1397
    %1463 = vmatprep.subr.bf16.mxu0 0
    %1464 = vmatpush1.bf16.msra.mxu0 %v1398
    %1465 = vmatprep.subr.bf16.mxu0 0
    %1466 = vmatpush1.bf16.msra.mxu0 %v1399
    %1467 = vmatprep.subr.bf16.mxu0 0
    %1468 = vmatpush1.bf16.msra.mxu0 %v1400
    %1469 = vmatprep.subr.bf16.mxu0 0
    %1470 = vmatpush1.bf16.msra.mxu0 %v1401
    %1471 = vmatprep.subr.bf16.mxu0 0
    %1472 = vmatpush1.bf16.msra.mxu0 %v1402
    %1473 = vmatprep.subr.bf16.mxu0 0
    %1474 = vmatpush1.bf16.msra.mxu0 %v1403
    %1475 = vmatprep.subr.bf16.mxu0 0
    %1476 = vmatpush1.bf16.msra.mxu0 %v1404
    %1477 = vmatprep.subr.bf16.mxu0 0
    %1478 = vmatpush1.bf16.msra.mxu0 %v1405
    %1479 = vmatprep.subr.bf16.mxu0 0
    %1480 = vmatpush1.bf16.msra.mxu0 %v1406
    %1481 = vmatprep.subr.bf16.mxu0 0
    %1482 = vmatpush1.bf16.msra.mxu0 %v1407
    %1483 = vmatprep.subr.bf16.mxu0 0
    %1484 = vmatpush1.bf16.msra.mxu0 %v1408
    %1485 = vmatprep.subr.bf16.mxu0 0
    %1486 = vmatpush1.bf16.msra.mxu0 %v1409
    %1487 = vmatprep.subr.bf16.mxu0 0
    %1488 = vmatpush1.bf16.msra.mxu0 %v1410
    %1489 = vmatprep.subr.bf16.mxu0 0
    %1490 = vmatpush1.bf16.msra.mxu0 %v1411
    %1491 = vmatprep.subr.bf16.mxu0 0
    %1492 = vmatpush1.bf16.msra.mxu0 %v1412
    %1493 = vmatprep.mubr.bf16.mxu0 %v1190
    %1494 = vmatmul.mubr.bf16.gmra.mrb[0].mxu0 %v1189
    %v1495 = vpop.f32.mrb[0].mxu0
    %v1496 = vadd.f32 0.0, %v1495
    %v1497 = vpop.f32.mrb[0].mxu0
    %v1498 = vpop.f32.mrb[0].mxu0
    %v1499 = vadd.f32 0.0, %v1498
    %v1500 = vpop.f32.mrb[0].mxu0
    %1501 = vmatprep.mubr.bf16.mxu0 %v1194
    %1502 = vmatmul.mubr.bf16.gmra.mrb[0].mxu0 %v1193
    %v1503 = vpop.f32.mrb[0].mxu0
    %v1504 = vadd.f32 0.0, %v1503
    %v1505 = vpop.f32.mrb[0].mxu0
    %v1506 = vpop.f32.mrb[0].mxu0
    %v1507 = vadd.f32 0.0, %v1506
    %v1508 = vpop.f32.mrb[0].mxu0
    %1509 = vmatprep.mubr.bf16.mxu0 %v1198
    %1510 = vmatmul.mubr.bf16.gmra.mrb[0].mxu0 %v1197
    %v1511 = vpop.f32.mrb[0].mxu0
    %v1512 = vadd.f32 0.0, %v1511
    %v1513 = vpop.f32.mrb[0].mxu0
    %v1514 = vpop.f32.mrb[0].mxu0
    %v1515 = vadd.f32 0.0, %v1514
    %v1516 = vpop.f32.mrb[0].mxu0
    %1517 = vmatprep.mubr.bf16.mxu0 %v1202
    %1518 = vmatmul.mubr.bf16.gmra.mrb[0].mxu0 %v1201
    %v1519 = vpop.f32.mrb[0].mxu0
    %v1520 = vadd.f32 0.0, %v1519
    %v1521 = vpop.f32.mrb[0].mxu0
    %v1522 = vpop.f32.mrb[0].mxu0
    %v1523 = vadd.f32 0.0, %v1522
    %v1524 = vpop.f32.mrb[0].mxu0
    %1525 = vdwg.mxu0
    %1526 = vmatprep.subr.bf16.mxu0 0
    %1527 = vmatpush1.bf16.msra.mxu0 %v1413
    %1528 = vmatprep.subr.bf16.mxu0 0
    %1529 = vmatpush1.bf16.msra.mxu0 %v1414
    %1530 = vmatprep.subr.bf16.mxu0 0
    %1531 = vmatpush1.bf16.msra.mxu0 %v1415
    %1532 = vmatprep.subr.bf16.mxu0 0
    %1533 = vmatpush1.bf16.msra.mxu0 %v1416
    %1534 = vmatprep.subr.bf16.mxu0 0
    %1535 = vmatpush1.bf16.msra.mxu0 %v1417
    %1536 = vmatprep.subr.bf16.mxu0 0
    %1537 = vmatpush1.bf16.msra.mxu0 %v1418
    %1538 = vmatprep.subr.bf16.mxu0 0
    %1539 = vmatpush1.bf16.msra.mxu0 %v1419
    %1540 = vmatprep.subr.bf16.mxu0 0
    %1541 = vmatpush1.bf16.msra.mxu0 %v1420
    %1542 = vmatprep.subr.bf16.mxu0 0
    %1543 = vmatpush1.bf16.msra.mxu0 %v1421
    %1544 = vmatprep.subr.bf16.mxu0 0
    %1545 = vmatpush1.bf16.msra.mxu0 %v1422
    %1546 = vmatprep.subr.bf16.mxu0 0
    %1547 = vmatpush1.bf16.msra.mxu0 %v1423
    %1548 = vmatprep.subr.bf16.mxu0 0
    %1549 = vmatpush1.bf16.msra.mxu0 %v1424
    %1550 = vmatprep.subr.bf16.mxu0 0
    %1551 = vmatpush1.bf16.msra.mxu0 %v1425
    %1552 = vmatprep.subr.bf16.mxu0 0
    %1553 = vmatpush1.bf16.msra.mxu0 %v1426
    %1554 = vmatprep.subr.bf16.mxu0 0
    %1555 = vmatpush1.bf16.msra.mxu0 %v1427
    %1556 = vmatprep.subr.bf16.mxu0 0
    %1557 = vmatpush1.bf16.msra.mxu0 %v1428
    %1558 = vmatprep.mubr.bf16.mxu0 %v1192
    %1559 = vmatmul.mubr.bf16.gmra.mrb[0].mxu0 %v1191
    %v1560 = vpop.f32.mrb[0].mxu0
    %v1561 = vadd.f32 %v1496, %v1560
    %v1562 = vpop.f32.mrb[0].mxu0
    %v1563 = vpop.f32.mrb[0].mxu0
    %v1564 = vadd.f32 %v1499, %v1563
    %v1565 = vpop.f32.mrb[0].mxu0
    %1566 = vmatprep.mubr.bf16.mxu0 %v1196
    %1567 = vmatmul.mubr.bf16.gmra.mrb[0].mxu0 %v1195
    %v1568 = vpop.f32.mrb[0].mxu0
    %v1569 = vadd.f32 %v1504, %v1568
    %v1570 = vpop.f32.mrb[0].mxu0
    %v1571 = vpop.f32.mrb[0].mxu0
    %v1572 = vadd.f32 %v1507, %v1571
    %v1573 = vpop.f32.mrb[0].mxu0
    %1574 = vmatprep.mubr.bf16.mxu0 %v1200
    %1575 = vmatmul.mubr.bf16.gmra.mrb[0].mxu0 %v1199
    %v1576 = vpop.f32.mrb[0].mxu0
    %v1577 = vadd.f32 %v1512, %v1576
    %v1578 = vpop.f32.mrb[0].mxu0
    %v1579 = vpop.f32.mrb[0].mxu0
    %v1580 = vadd.f32 %v1515, %v1579
    %v1581 = vpop.f32.mrb[0].mxu0
    %1582 = vmatprep.mubr.bf16.mxu0 %v1204
    %1583 = vmatmul.mubr.bf16.gmra.mrb[0].mxu0 %v1203
    %v1584 = vpop.f32.mrb[0].mxu0
    %v1585 = vadd.f32 %v1520, %v1584
    %v1586 = vpop.f32.mrb[0].mxu0
    %v1587 = vpop.f32.mrb[0].mxu0
    %v1588 = vadd.f32 %v1523, %v1587
    %v1589 = vpop.f32.mrb[0].mxu0
    %1590 = vdwg.mxu0
    %vm1591 = vcmp.gt.f32.partialorder %v1561, 0.0
    %vm1592 = vcmp.gt.f32.partialorder %v1564, 0.0
    %vm1593 = vcmp.gt.f32.partialorder %v1569, 0.0
    %vm1594 = vcmp.gt.f32.partialorder %v1572, 0.0
    %vm1595 = vcmp.gt.f32.partialorder %v1577, 0.0
    %vm1596 = vcmp.gt.f32.partialorder %v1580, 0.0
    %vm1597 = vcmp.gt.f32.partialorder %v1585, 0.0
    %vm1598 = vcmp.gt.f32.partialorder %v1588, 0.0
    %v1599 = vmul.f32 %v1561, 0.2
    %v1600 = vmul.f32 %v1564, 0.2
    %v1601 = vmul.f32 %v1569, 0.2
    %v1602 = vmul.f32 %v1572, 0.2
    %v1603 = vmul.f32 %v1577, 0.2
    %v1604 = vmul.f32 %v1580, 0.2
    %v1605 = vmul.f32 %v1585, 0.2
    %v1606 = vmul.f32 %v1588, 0.2
    %v1607 = vsel %vm1591, %v1561, %v1599
    %v1608 = vsel %vm1592, %v1564, %v1600
    %v1609 = vsel %vm1593, %v1569, %v1601
    %v1610 = vsel %vm1594, %v1572, %v1602
    %v1611 = vsel %vm1595, %v1577, %v1603
    %v1612 = vsel %vm1596, %v1580, %v1604
    %v1613 = vsel %vm1597, %v1585, %v1605
    %v1614 = vsel %vm1598, %v1588, %v1606
    %v1615 = vlaneseq
    %v1616 = vshrl.u32 %v1615, 7
    %vm1617 = vcmp.lt.s32.totalorder %v1616, 5
    %v1618 = vsel %vm1617, %v1607, -inf
    %v1619 = vsel %vm1617, %v1608, -inf
    %v1620 = vsel %vm1617, %v1609, -inf
    %v1621 = vsel %vm1617, %v1610, -inf
    %v1622 = vsel %vm1617, %v1611, -inf
    %v1623 = vsel %vm1617, %v1612, -inf
    %v1624 = vsel %vm1617, %v1613, -inf
    %v1625 = vsel %vm1617, %v1614, -inf
    %vm1626 = vcmask 31744
    %v1627 = vsel %vm1626, %v1618, -inf
    %v1628 = vrot.slane %v1627, 4
    %v1629 = vmax.f32 %v1627, %v1628
    %v1630 = vrot.slane %v1629, 2
    %v1631 = vmax.f32 %v1629, %v1630
    %v1632 = vrot.slane %v1631, 1
    %v1633 = vmax.f32 %v1631, %v1632
    %v1634 = vsel %vm1626, %v1619, -inf
    %v1635 = vrot.slane %v1634, 4
    %v1636 = vmax.f32 %v1634, %v1635
    %v1637 = vrot.slane %v1636, 2
    %v1638 = vmax.f32 %v1636, %v1637
    %v1639 = vrot.slane %v1638, 1
    %v1640 = vmax.f32 %v1638, %v1639
    %v1641 = vsel %vm1626, %v1620, -inf
    %v1642 = vrot.slane %v1641, 4
    %v1643 = vmax.f32 %v1641, %v1642
    %v1644 = vrot.slane %v1643, 2
    %v1645 = vmax.f32 %v1643, %v1644
    %v1646 = vrot.slane %v1645, 1
    %v1647 = vmax.f32 %v1645, %v1646
    %v1648 = vsel %vm1626, %v1621, -inf
    %v1649 = vrot.slane %v1648, 4
    %v1650 = vmax.f32 %v1648, %v1649
    %v1651 = vrot.slane %v1650, 2
    %v1652 = vmax.f32 %v1650, %v1651
    %v1653 = vrot.slane %v1652, 1
    %v1654 = vmax.f32 %v1652, %v1653
    %v1655 = vsel %vm1626, %v1622, -inf
    %v1656 = vrot.slane %v1655, 4
    %v1657 = vmax.f32 %v1655, %v1656
    %v1658 = vrot.slane %v1657, 2
    %v1659 = vmax.f32 %v1657, %v1658
    %v1660 = vrot.slane %v1659, 1
    %v1661 = vmax.f32 %v1659, %v1660
    %v1662 = vsel %vm1626, %v1623, -inf
    %v1663 = vrot.slane %v1662, 4
    %v1664 = vmax.f32 %v1662, %v1663
    %v1665 = vrot.slane %v1664, 2
    %v1666 = vmax.f32 %v1664, %v1665
    %v1667 = vrot.slane %v1666, 1
    %v1668 = vmax.f32 %v1666, %v1667
    %v1669 = vsel %vm1626, %v1624, -inf
    %v1670 = vrot.slane %v1669, 4
    %v1671 = vmax.f32 %v1669, %v1670
    %v1672 = vrot.slane %v1671, 2
    %v1673 = vmax.f32 %v1671, %v1672
    %v1674 = vrot.slane %v1673, 1
    %v1675 = vmax.f32 %v1673, %v1674
    %v1676 = vsel %vm1626, %v1625, -inf
    %v1677 = vrot.slane %v1676, 4
    %v1678 = vmax.f32 %v1676, %v1677
    %v1679 = vrot.slane %v1678, 2
    %v1680 = vmax.f32 %v1678, %v1679
    %v1681 = vrot.slane %v1680, 1
    %v1682 = vmax.f32 %v1680, %v1681
    %v1683 = vsub.f32 %v1607, %v1633
    %v1684 = vsub.f32 %v1608, %v1640
    %v1685 = vsub.f32 %v1609, %v1647
    %v1686 = vsub.f32 %v1610, %v1654
    %v1687 = vsub.f32 %v1611, %v1661
    %v1688 = vsub.f32 %v1612, %v1668
    %v1689 = vsub.f32 %v1613, %v1675
    %v1690 = vsub.f32 %v1614, %v1682
    %v1691 = vmul.f32 %v1683, 1.442695
    %v1692 = vpow.pop %v1691
    %v1693 = vmul.f32 %v1684, 1.442695
    %v1694 = vpow.pop %v1693
    %v1695 = vmul.f32 %v1685, 1.442695
    %v1696 = vpow.pop %v1695
    %v1697 = vmul.f32 %v1686, 1.442695
    %v1698 = vpow.pop %v1697
    %v1699 = vmul.f32 %v1687, 1.442695
    %v1700 = vpow.pop %v1699
    %v1701 = vmul.f32 %v1688, 1.442695
    %v1702 = vpow.pop %v1701
    %v1703 = vmul.f32 %v1689, 1.442695
    %v1704 = vpow.pop %v1703
    %v1705 = vmul.f32 %v1690, 1.442695
    %v1706 = vpow.pop %v1705
    %v1707 = vsel %vm1617, %v1692, 0.0
    %v1708 = vsel %vm1617, %v1694, 0.0
    %v1709 = vsel %vm1617, %v1696, 0.0
    %v1710 = vsel %vm1617, %v1698, 0.0
    %v1711 = vsel %vm1617, %v1700, 0.0
    %v1712 = vsel %vm1617, %v1702, 0.0
    %v1713 = vsel %vm1617, %v1704, 0.0
    %v1714 = vsel %vm1617, %v1706, 0.0
    %v1715 = vsel %vm1626, %v1707, 0.0
    %v1716 = vrot.slane %v1715, 4
    %v1717 = vadd.f32 %v1715, %v1716
    %v1718 = vrot.slane %v1717, 2
    %v1719 = vadd.f32 %v1717, %v1718
    %v1720 = vrot.slane %v1719, 1
    %v1721 = vadd.f32 %v1719, %v1720
    %v1722 = vsel %vm1626, %v1708, 0.0
    %v1723 = vrot.slane %v1722, 4
    %v1724 = vadd.f32 %v1722, %v1723
    %v1725 = vrot.slane %v1724, 2
    %v1726 = vadd.f32 %v1724, %v1725
    %v1727 = vrot.slane %v1726, 1
    %v1728 = vadd.f32 %v1726, %v1727
    %v1729 = vsel %vm1626, %v1709, 0.0
    %v1730 = vrot.slane %v1729, 4
    %v1731 = vadd.f32 %v1729, %v1730
    %v1732 = vrot.slane %v1731, 2
    %v1733 = vadd.f32 %v1731, %v1732
    %v1734 = vrot.slane %v1733, 1
    %v1735 = vadd.f32 %v1733, %v1734
    %v1736 = vsel %vm1626, %v1710, 0.0
    %v1737 = vrot.slane %v1736, 4
    %v1738 = vadd.f32 %v1736, %v1737
    %v1739 = vrot.slane %v1738, 2
    %v1740 = vadd.f32 %v1738, %v1739
    %v1741 = vrot.slane %v1740, 1
    %v1742 = vadd.f32 %v1740, %v1741
    %v1743 = vsel %vm1626, %v1711, 0.0
    %v1744 = vrot.slane %v1743, 4
    %v1745 = vadd.f32 %v1743, %v1744
    %v1746 = vrot.slane %v1745, 2
    %v1747 = vadd.f32 %v1745, %v1746
    %v1748 = vrot.slane %v1747, 1
    %v1749 = vadd.f32 %v1747, %v1748
    %v1750 = vsel %vm1626, %v1712, 0.0
    %v1751 = vrot.slane %v1750, 4
    %v1752 = vadd.f32 %v1750, %v1751
    %v1753 = vrot.slane %v1752, 2
    %v1754 = vadd.f32 %v1752, %v1753
    %v1755 = vrot.slane %v1754, 1
    %v1756 = vadd.f32 %v1754, %v1755
    %v1757 = vsel %vm1626, %v1713, 0.0
    %v1758 = vrot.slane %v1757, 4
    %v1759 = vadd.f32 %v1757, %v1758
    %v1760 = vrot.slane %v1759, 2
    %v1761 = vadd.f32 %v1759, %v1760
    %v1762 = vrot.slane %v1761, 1
    %v1763 = vadd.f32 %v1761, %v1762
    %v1764 = vsel %vm1626, %v1714, 0.0
    %v1765 = vrot.slane %v1764, 4
    %v1766 = vadd.f32 %v1764, %v1765
    %v1767 = vrot.slane %v1766, 2
    %v1768 = vadd.f32 %v1766, %v1767
    %v1769 = vrot.slane %v1768, 1
    %v1770 = vadd.f32 %v1768, %v1769
    %v1771 = vrcp.pop %v1721
    %v1772 = vrcp.pop %v1728
    %v1773 = vrcp.pop %v1735
    %v1774 = vrcp.pop %v1742
    %v1775 = vrcp.pop %v1749
    %v1776 = vrcp.pop %v1756
    %v1777 = vrcp.pop %v1763
    %v1778 = vrcp.pop %v1770
    %v1779 = vmul.f32 %v1707, %v1771
    %v1780 = vmul.f32 %v1708, %v1772
    %v1781 = vmul.f32 %v1709, %v1773
    %v1782 = vmul.f32 %v1710, %v1774
    %v1783 = vmul.f32 %v1711, %v1775
    %v1784 = vmul.f32 %v1712, %v1776
    %v1785 = vmul.f32 %v1713, %v1777
    %v1786 = vmul.f32 %v1714, %v1778
    %v1787 = vpack.c.bf16 %v1780, %v1779
    %v1788 = vpack.c.bf16 %v1782, %v1781
    %v1789 = vpack.c.bf16 %v1784, %v1783
    %v1790 = vpack.c.bf16 %v1786, %v1785
    %v1791 = vld [vmem:[%s3] sm:$0xff]
    %v1793 = vcombine.high %v1791, %v1791
    %v1795 = vunpack.c.l.s4 1983009808
    %v1796 = vunpack.c.0.s8 %v1795
    %v1797 = vlaneseq
    %v1798 = vshrl.u32 %v1797, 7
    %v1799 = vsub.s32 %v1796, %v1798
    %v1800 = vrot.slane %v1791, %v1799
    %v1802 = vunpack.c.l.s4 1983009808
    %v1803 = vunpack.c.0.s8 %v1802
    %v1804 = vlaneseq
    %v1805 = vshrl.u32 %v1804, 7
    %v1806 = vsub.s32 %v1803, %v1805
    %v1807 = vrot.slane %v1793, %v1806
    %v1808 = vcombine.high %v1800, %v1800
    %v1809 = vcombine.high %v1807, %v1807
    %v1811 = vsel %vm1626, %v1787, 0
    %v1814 = vsel %vm1626, %v1788, 0
    %v1817 = vsel %vm1626, %v1789, 0
    %v1820 = vsel %vm1626, %v1790, 0
    %vm1822 = vcmask 1041408
    %v1824 = vsel %vm1822, %v1800, 0
    %v1827 = vsel %vm1822, %v1808, 0
    %v1830 = vsel %vm1822, %v1807, 0
    %v1833 = vsel %vm1822, %v1809, 0
    %1835 = vmatprep.subr.bf16.mxu0 %v1827
    %1836 = vmatpush1.bf16.msra.mxu0 %v1824
    %1837 = vmatprep.subr.bf16.mxu0 0
    %1838 = vmatpush1.bf16.msra.mxu0 0
    %1839 = vmatprep.subr.bf16.mxu0 0
    %1840 = vmatpush1.bf16.msra.mxu0 0
    %1841 = vmatprep.subr.bf16.mxu0 0
    %1842 = vmatpush1.bf16.msra.mxu0 0
    %1843 = vmatprep.subr.bf16.mxu0 0
    %1844 = vmatpush1.bf16.msra.mxu0 0
    %1845 = vmatprep.subr.bf16.mxu0 0
    %1846 = vmatpush1.bf16.msra.mxu0 0
    %1847 = vmatprep.subr.bf16.mxu0 0
    %1848 = vmatpush1.bf16.msra.mxu0 0
    %1849 = vmatprep.subr.bf16.mxu0 0
    %1850 = vmatpush1.bf16.msra.mxu0 0
    %1851 = vmatprep.subr.bf16.mxu0 0
    %1852 = vmatpush1.bf16.msra.mxu0 0
    %1853 = vmatprep.subr.bf16.mxu0 0
    %1854 = vmatpush1.bf16.msra.mxu0 0
    %1855 = vmatprep.subr.bf16.mxu0 0
    %1856 = vmatpush1.bf16.msra.mxu0 0
    %1857 = vmatprep.subr.bf16.mxu0 0
    %1858 = vmatpush1.bf16.msra.mxu0 0
    %1859 = vmatprep.subr.bf16.mxu0 0
    %1860 = vmatpush1.bf16.msra.mxu0 0
    %1861 = vmatprep.subr.bf16.mxu0 0
    %1862 = vmatpush1.bf16.msra.mxu0 0
    %1863 = vmatprep.subr.bf16.mxu0 0
    %1864 = vmatpush1.bf16.msra.mxu0 0
    %1865 = vmatprep.subr.bf16.mxu0 0
    %1866 = vmatpush1.bf16.msra.mxu0 0
    %1867 = vmatprep.mubr.bf16.mxu0 0
    %1868 = vmatmul.mubr.bf16.gmra.mrb[0].mxu0 %v1811
    %v1869 = vpop.f32.mrb[0].mxu0
    %v1870 = vadd.f32 0.0, %v1869
    %v1871 = vpop.f32.mrb[0].mxu0
    %v1872 = vadd.f32 0.0, %v1871
    %v1873 = vpop.f32.mrb[0].mxu0
    %v1874 = vadd.f32 0.0, %v1873
    %v1875 = vpop.f32.mrb[0].mxu0
    %v1876 = vadd.f32 0.0, %v1875
    %1877 = vmatprep.mubr.bf16.mxu0 0
    %1878 = vmatmul.mubr.bf16.gmra.mrb[0].mxu0 %v1814
    %v1879 = vpop.f32.mrb[0].mxu0
    %v1880 = vadd.f32 0.0, %v1879
    %v1881 = vpop.f32.mrb[0].mxu0
    %v1882 = vadd.f32 0.0, %v1881
    %v1883 = vpop.f32.mrb[0].mxu0
    %v1884 = vadd.f32 0.0, %v1883
    %v1885 = vpop.f32.mrb[0].mxu0
    %v1886 = vadd.f32 0.0, %v1885
    %1887 = vmatprep.mubr.bf16.mxu0 0
    %1888 = vmatmul.mubr.bf16.gmra.mrb[0].mxu0 %v1817
    %v1889 = vpop.f32.mrb[0].mxu0
    %v1890 = vadd.f32 0.0, %v1889
    %v1891 = vpop.f32.mrb[0].mxu0
    %v1892 = vadd.f32 0.0, %v1891
    %v1893 = vpop.f32.mrb[0].mxu0
    %v1894 = vadd.f32 0.0, %v1893
    %v1895 = vpop.f32.mrb[0].mxu0
    %v1896 = vadd.f32 0.0, %v1895
    %1897 = vmatprep.mubr.bf16.mxu0 0
    %1898 = vmatmul.mubr.bf16.gmra.mrb[0].mxu0 %v1820
    %v1899 = vpop.f32.mrb[0].mxu0
    %v1900 = vadd.f32 0.0, %v1899
    %v1901 = vpop.f32.mrb[0].mxu0
    %v1902 = vadd.f32 0.0, %v1901
    %v1903 = vpop.f32.mrb[0].mxu0
    %v1904 = vadd.f32 0.0, %v1903
    %v1905 = vpop.f32.mrb[0].mxu0
    %v1906 = vadd.f32 0.0, %v1905
    %1907 = vdwg.mxu0
    %1908 = vmatprep.subr.bf16.mxu0 %v1833
    %1909 = vmatpush1.bf16.msra.mxu0 %v1830
    %1910 = vmatprep.subr.bf16.mxu0 0
    %1911 = vmatpush1.bf16.msra.mxu0 0
    %1912 = vmatprep.subr.bf16.mxu0 0
    %1913 = vmatpush1.bf16.msra.mxu0 0
    %1914 = vmatprep.subr.bf16.mxu0 0
    %1915 = vmatpush1.bf16.msra.mxu0 0
    %1916 = vmatprep.subr.bf16.mxu0 0
    %1917 = vmatpush1.bf16.msra.mxu0 0
    %1918 = vmatprep.subr.bf16.mxu0 0
    %1919 = vmatpush1.bf16.msra.mxu0 0
    %1920 = vmatprep.subr.bf16.mxu0 0
    %1921 = vmatpush1.bf16.msra.mxu0 0
    %1922 = vmatprep.subr.bf16.mxu0 0
    %1923 = vmatpush1.bf16.msra.mxu0 0
    %1924 = vmatprep.subr.bf16.mxu0 0
    %1925 = vmatpush1.bf16.msra.mxu0 0
    %1926 = vmatprep.subr.bf16.mxu0 0
    %1927 = vmatpush1.bf16.msra.mxu0 0
    %1928 = vmatprep.subr.bf16.mxu0 0
    %1929 = vmatpush1.bf16.msra.mxu0 0
    %1930 = vmatprep.subr.bf16.mxu0 0
    %1931 = vmatpush1.bf16.msra.mxu0 0
    %1932 = vmatprep.subr.bf16.mxu0 0
    %1933 = vmatpush1.bf16.msra.mxu0 0
    %1934 = vmatprep.subr.bf16.mxu0 0
    %1935 = vmatpush1.bf16.msra.mxu0 0
    %1936 = vmatprep.subr.bf16.mxu0 0
    %1937 = vmatpush1.bf16.msra.mxu0 0
    %1938 = vmatprep.subr.bf16.mxu0 0
    %1939 = vmatpush1.bf16.msra.mxu0 0
    %1940 = vmatprep.mubr.bf16.mxu0 0
    %1941 = vmatmul.mubr.bf16.gmra.mrb[0].mxu0 %v1811
    %v1942 = vpop.f32.mrb[0].mxu0
    %v1943 = vadd.f32 0.0, %v1942
    %v1944 = vpop.f32.mrb[0].mxu0
    %v1945 = vadd.f32 0.0, %v1944
    %v1946 = vpop.f32.mrb[0].mxu0
    %v1947 = vadd.f32 0.0, %v1946
    %v1948 = vpop.f32.mrb[0].mxu0
    %v1949 = vadd.f32 0.0, %v1948
    %1950 = vmatprep.mubr.bf16.mxu0 0
    %1951 = vmatmul.mubr.bf16.gmra.mrb[0].mxu0 %v1814
    %v1952 = vpop.f32.mrb[0].mxu0
    %v1953 = vadd.f32 0.0, %v1952
    %v1954 = vpop.f32.mrb[0].mxu0
    %v1955 = vadd.f32 0.0, %v1954
    %v1956 = vpop.f32.mrb[0].mxu0
    %v1957 = vadd.f32 0.0, %v1956
    %v1958 = vpop.f32.mrb[0].mxu0
    %v1959 = vadd.f32 0.0, %v1958
    %1960 = vmatprep.mubr.bf16.mxu0 0
    %1961 = vmatmul.mubr.bf16.gmra.mrb[0].mxu0 %v1817
    %v1962 = vpop.f32.mrb[0].mxu0
    %v1963 = vadd.f32 0.0, %v1962
    %v1964 = vpop.f32.mrb[0].mxu0
    %v1965 = vadd.f32 0.0, %v1964
    %v1966 = vpop.f32.mrb[0].mxu0
    %v1967 = vadd.f32 0.0, %v1966
    %v1968 = vpop.f32.mrb[0].mxu0
    %v1969 = vadd.f32 0.0, %v1968
    %1970 = vmatprep.mubr.bf16.mxu0 0
    %1971 = vmatmul.mubr.bf16.gmra.mrb[0].mxu0 %v1820
    %v1972 = vpop.f32.mrb[0].mxu0
    %v1973 = vadd.f32 0.0, %v1972
    %v1974 = vpop.f32.mrb[0].mxu0
    %v1975 = vadd.f32 0.0, %v1974
    %v1976 = vpop.f32.mrb[0].mxu0
    %v1977 = vadd.f32 0.0, %v1976
    %v1978 = vpop.f32.mrb[0].mxu0
    %v1979 = vadd.f32 0.0, %v1978
    %1980 = vdwg.mxu0
    %v1981 = vmul.f32 %v1005, %v1870
    %v1982 = vmul.f32 %v1007, %v1872
    %v1983 = vmul.f32 %v1151, %v1943
    %v1984 = vmul.f32 %v1153, %v1945
    %v1985 = vmul.f32 %v1009, %v1874
    %v1986 = vmul.f32 %v1011, %v1876
    %v1987 = vmul.f32 %v1155, %v1947
    %v1988 = vmul.f32 %v1157, %v1949
    %v1989 = vmul.f32 %v1015, %v1880
    %v1990 = vmul.f32 %v1017, %v1882
    %v1991 = vmul.f32 %v1161, %v1953
    %v1992 = vmul.f32 %v1163, %v1955
    %v1993 = vmul.f32 %v1019, %v1884
    %v1994 = vmul.f32 %v1021, %v1886
    %v1995 = vmul.f32 %v1165, %v1957
    %v1996 = vmul.f32 %v1167, %v1959
    %v1997 = vmul.f32 %v1025, %v1890
    %v1998 = vmul.f32 %v1027, %v1892
    %v1999 = vmul.f32 %v1171, %v1963
    %v2000 = vmul.f32 %v1173, %v1965
    %v2001 = vmul.f32 %v1029, %v1894
    %v2002 = vmul.f32 %v1031, %v1896
    %v2003 = vmul.f32 %v1175, %v1967
    %v2004 = vmul.f32 %v1177, %v1969
    %v2005 = vmul.f32 %v1035, %v1900
    %v2006 = vmul.f32 %v1037, %v1902
    %v2007 = vmul.f32 %v1181, %v1973
    %v2008 = vmul.f32 %v1183, %v1975
    %v2009 = vmul.f32 %v1039, %v1904
    %v2010 = vmul.f32 %v1041, %v1906
    %v2011 = vmul.f32 %v1185, %v1977
    %v2012 = vmul.f32 %v1187, %v1979
    %v2013 = vrot.slane %v1981, 4
    %v2014 = vadd.f32 %v1981, %v2013
    %v2015 = vrot.slane %v2014, 2
    %v2016 = vadd.f32 %v2014, %v2015
    %v2017 = vrot.slane %v2016, 1
    %v2018 = vadd.f32 %v2016, %v2017
    %v2019 = vrot.slane %v1982, 4
    %v2020 = vadd.f32 %v1982, %v2019
    %v2021 = vrot.slane %v2020, 2
    %v2022 = vadd.f32 %v2020, %v2021
    %v2023 = vrot.slane %v2022, 1
    %v2024 = vadd.f32 %v2022, %v2023
    %v2025 = vrot.slane %v1983, 4
    %v2026 = vadd.f32 %v1983, %v2025
    %v2027 = vrot.slane %v2026, 2
    %v2028 = vadd.f32 %v2026, %v2027
    %v2029 = vrot.slane %v2028, 1
    %v2030 = vadd.f32 %v2028, %v2029
    %v2031 = vrot.slane %v1984, 4
    %v2032 = vadd.f32 %v1984, %v2031
    %v2033 = vrot.slane %v2032, 2
    %v2034 = vadd.f32 %v2032, %v2033
    %v2035 = vrot.slane %v2034, 1
    %v2036 = vadd.f32 %v2034, %v2035
    %v2037 = vrot.slane %v1985, 4
    %v2038 = vadd.f32 %v1985, %v2037
    %v2039 = vrot.slane %v2038, 2
    %v2040 = vadd.f32 %v2038, %v2039
    %v2041 = vrot.slane %v2040, 1
    %v2042 = vadd.f32 %v2040, %v2041
    %v2043 = vrot.slane %v1986, 4
    %v2044 = vadd.f32 %v1986, %v2043
    %v2045 = vrot.slane %v2044, 2
    %v2046 = vadd.f32 %v2044, %v2045
    %v2047 = vrot.slane %v2046, 1
    %v2048 = vadd.f32 %v2046, %v2047
    %v2049 = vrot.slane %v1987, 4
    %v2050 = vadd.f32 %v1987, %v2049
    %v2051 = vrot.slane %v2050, 2
    %v2052 = vadd.f32 %v2050, %v2051
    %v2053 = vrot.slane %v2052, 1
    %v2054 = vadd.f32 %v2052, %v2053
    %v2055 = vrot.slane %v1988, 4
    %v2056 = vadd.f32 %v1988, %v2055
    %v2057 = vrot.slane %v2056, 2
    %v2058 = vadd.f32 %v2056, %v2057
    %v2059 = vrot.slane %v2058, 1
    %v2060 = vadd.f32 %v2058, %v2059
    %v2061 = vrot.slane %v1989, 4
    %v2062 = vadd.f32 %v1989, %v2061
    %v2063 = vrot.slane %v2062, 2
    %v2064 = vadd.f32 %v2062, %v2063
    %v2065 = vrot.slane %v2064, 1
    %v2066 = vadd.f32 %v2064, %v2065
    %v2067 = vrot.slane %v1990, 4
    %v2068 = vadd.f32 %v1990, %v2067
    %v2069 = vrot.slane %v2068, 2
    %v2070 = vadd.f32 %v2068, %v2069
    %v2071 = vrot.slane %v2070, 1
    %v2072 = vadd.f32 %v2070, %v2071
    %v2073 = vrot.slane %v1991, 4
    %v2074 = vadd.f32 %v1991, %v2073
    %v2075 = vrot.slane %v2074, 2
    %v2076 = vadd.f32 %v2074, %v2075
    %v2077 = vrot.slane %v2076, 1
    %v2078 = vadd.f32 %v2076, %v2077
    %v2079 = vrot.slane %v1992, 4
    %v2080 = vadd.f32 %v1992, %v2079
    %v2081 = vrot.slane %v2080, 2
    %v2082 = vadd.f32 %v2080, %v2081
    %v2083 = vrot.slane %v2082, 1
    %v2084 = vadd.f32 %v2082, %v2083
    %v2085 = vrot.slane %v1993, 4
    %v2086 = vadd.f32 %v1993, %v2085
    %v2087 = vrot.slane %v2086, 2
    %v2088 = vadd.f32 %v2086, %v2087
    %v2089 = vrot.slane %v2088, 1
    %v2090 = vadd.f32 %v2088, %v2089
    %v2091 = vrot.slane %v1994, 4
    %v2092 = vadd.f32 %v1994, %v2091
    %v2093 = vrot.slane %v2092, 2
    %v2094 = vadd.f32 %v2092, %v2093
    %v2095 = vrot.slane %v2094, 1
    %v2096 = vadd.f32 %v2094, %v2095
    %v2097 = vrot.slane %v1995, 4
    %v2098 = vadd.f32 %v1995, %v2097
    %v2099 = vrot.slane %v2098, 2
    %v2100 = vadd.f32 %v2098, %v2099
    %v2101 = vrot.slane %v2100, 1
    %v2102 = vadd.f32 %v2100, %v2101
    %v2103 = vrot.slane %v1996, 4
    %v2104 = vadd.f32 %v1996, %v2103
    %v2105 = vrot.slane %v2104, 2
    %v2106 = vadd.f32 %v2104, %v2105
    %v2107 = vrot.slane %v2106, 1
    %v2108 = vadd.f32 %v2106, %v2107
    %v2109 = vrot.slane %v1997, 4
    %v2110 = vadd.f32 %v1997, %v2109
    %v2111 = vrot.slane %v2110, 2
    %v2112 = vadd.f32 %v2110, %v2111
    %v2113 = vrot.slane %v2112, 1
    %v2114 = vadd.f32 %v2112, %v2113
    %v2115 = vrot.slane %v1998, 4
    %v2116 = vadd.f32 %v1998, %v2115
    %v2117 = vrot.slane %v2116, 2
    %v2118 = vadd.f32 %v2116, %v2117
    %v2119 = vrot.slane %v2118, 1
    %v2120 = vadd.f32 %v2118, %v2119
    %v2121 = vrot.slane %v1999, 4
    %v2122 = vadd.f32 %v1999, %v2121
    %v2123 = vrot.slane %v2122, 2
    %v2124 = vadd.f32 %v2122, %v2123
    %v2125 = vrot.slane %v2124, 1
    %v2126 = vadd.f32 %v2124, %v2125
    %v2127 = vrot.slane %v2000, 4
    %v2128 = vadd.f32 %v2000, %v2127
    %v2129 = vrot.slane %v2128, 2
    %v2130 = vadd.f32 %v2128, %v2129
    %v2131 = vrot.slane %v2130, 1
    %v2132 = vadd.f32 %v2130, %v2131
    %v2133 = vrot.slane %v2001, 4
    %v2134 = vadd.f32 %v2001, %v2133
    %v2135 = vrot.slane %v2134, 2
    %v2136 = vadd.f32 %v2134, %v2135
    %v2137 = vrot.slane %v2136, 1
    %v2138 = vadd.f32 %v2136, %v2137
    %v2139 = vrot.slane %v2002, 4
    %v2140 = vadd.f32 %v2002, %v2139
    %v2141 = vrot.slane %v2140, 2
    %v2142 = vadd.f32 %v2140, %v2141
    %v2143 = vrot.slane %v2142, 1
    %v2144 = vadd.f32 %v2142, %v2143
    %v2145 = vrot.slane %v2003, 4
    %v2146 = vadd.f32 %v2003, %v2145
    %v2147 = vrot.slane %v2146, 2
    %v2148 = vadd.f32 %v2146, %v2147
    %v2149 = vrot.slane %v2148, 1
    %v2150 = vadd.f32 %v2148, %v2149
    %v2151 = vrot.slane %v2004, 4
    %v2152 = vadd.f32 %v2004, %v2151
    %v2153 = vrot.slane %v2152, 2
    %v2154 = vadd.f32 %v2152, %v2153
    %v2155 = vrot.slane %v2154, 1
    %v2156 = vadd.f32 %v2154, %v2155
    %v2157 = vrot.slane %v2005, 4
    %v2158 = vadd.f32 %v2005, %v2157
    %v2159 = vrot.slane %v2158, 2
    %v2160 = vadd.f32 %v2158, %v2159
    %v2161 = vrot.slane %v2160, 1
    %v2162 = vadd.f32 %v2160, %v2161
    %v2163 = vrot.slane %v2006, 4
    %v2164 = vadd.f32 %v2006, %v2163
    %v2165 = vrot.slane %v2164, 2
    %v2166 = vadd.f32 %v2164, %v2165
    %v2167 = vrot.slane %v2166, 1
    %v2168 = vadd.f32 %v2166, %v2167
    %v2169 = vrot.slane %v2007, 4
    %v2170 = vadd.f32 %v2007, %v2169
    %v2171 = vrot.slane %v2170, 2
    %v2172 = vadd.f32 %v2170, %v2171
    %v2173 = vrot.slane %v2172, 1
    %v2174 = vadd.f32 %v2172, %v2173
    %v2175 = vrot.slane %v2008, 4
    %v2176 = vadd.f32 %v2008, %v2175
    %v2177 = vrot.slane %v2176, 2
    %v2178 = vadd.f32 %v2176, %v2177
    %v2179 = vrot.slane %v2178, 1
    %v2180 = vadd.f32 %v2178, %v2179
    %v2181 = vrot.slane %v2009, 4
    %v2182 = vadd.f32 %v2009, %v2181
    %v2183 = vrot.slane %v2182, 2
    %v2184 = vadd.f32 %v2182, %v2183
    %v2185 = vrot.slane %v2184, 1
    %v2186 = vadd.f32 %v2184, %v2185
    %v2187 = vrot.slane %v2010, 4
    %v2188 = vadd.f32 %v2010, %v2187
    %v2189 = vrot.slane %v2188, 2
    %v2190 = vadd.f32 %v2188, %v2189
    %v2191 = vrot.slane %v2190, 1
    %v2192 = vadd.f32 %v2190, %v2191
    %v2193 = vrot.slane %v2011, 4
    %v2194 = vadd.f32 %v2011, %v2193
    %v2195 = vrot.slane %v2194, 2
    %v2196 = vadd.f32 %v2194, %v2195
    %v2197 = vrot.slane %v2196, 1
    %v2198 = vadd.f32 %v2196, %v2197
    %v2199 = vrot.slane %v2012, 4
    %v2200 = vadd.f32 %v2012, %v2199
    %v2201 = vrot.slane %v2200, 2
    %v2202 = vadd.f32 %v2200, %v2201
    %v2203 = vrot.slane %v2202, 1
    %v2204 = vadd.f32 %v2202, %v2203
    %vm2237 = vcmask 1041409
    %v2238 = vsel %vm2237, %v2042, %v2018
    %vm2239 = vcmask 1042434
    %v2240 = vsel %vm2239, %v2066, %v2238
    %vm2241 = vcmask 1043459
    %v2242 = vsel %vm2241, %v2090, %v2240
    %vm2243 = vcmask 1044484
    %v2244 = vsel %vm2243, %v2114, %v2242
    %vm2245 = vcmask 1045509
    %v2246 = vsel %vm2245, %v2138, %v2244
    %vm2247 = vcmask 1046534
    %v2248 = vsel %vm2247, %v2162, %v2246
    %vm2249 = vcmask 1047559
    %v2250 = vsel %vm2249, %v2186, %v2248
    %v2251 = vsel %vm2237, %v2048, %v2024
    %v2252 = vsel %vm2239, %v2072, %v2251
    %v2253 = vsel %vm2241, %v2096, %v2252
    %v2254 = vsel %vm2243, %v2120, %v2253
    %v2255 = vsel %vm2245, %v2144, %v2254
    %v2256 = vsel %vm2247, %v2168, %v2255
    %v2257 = vsel %vm2249, %v2192, %v2256
    %v2258 = vsel %vm2237, %v2054, %v2030
    %v2259 = vsel %vm2239, %v2078, %v2258
    %v2260 = vsel %vm2241, %v2102, %v2259
    %v2261 = vsel %vm2243, %v2126, %v2260
    %v2262 = vsel %vm2245, %v2150, %v2261
    %v2263 = vsel %vm2247, %v2174, %v2262
    %v2264 = vsel %vm2249, %v2198, %v2263
    %v2265 = vsel %vm2237, %v2060, %v2036
    %v2266 = vsel %vm2239, %v2084, %v2265
    %v2267 = vsel %vm2241, %v2108, %v2266
    %v2268 = vsel %vm2243, %v2132, %v2267
    %v2269 = vsel %vm2245, %v2156, %v2268
    %v2270 = vsel %vm2247, %v2180, %v2269
    %v2271 = vsel %vm2249, %v2204, %v2270
    %2276 = vst [vmem:[#allocation5] sm:$0xff] %v2250
    %2277 = vst [vmem:[#allocation5 + $0x8] sm:$0xff] %v2257
    %2278 = vst [vmem:[#allocation5 + $0x10] sm:$0xff] %v2264
    %2279 = vst [vmem:[#allocation5 + $0x18] sm:$0xff] %v2271
    // Predicated region
    $region22: #{tpu_custom_call.1} parent=1 // pred_check
      _
    $region23: #{tpu_custom_call.1} parent=1 // pred_check_branch
      %2281 = sbr.rel (0) target = $region25
    $region24: #{tpu_custom_call.1} parent=1 // pred_region
      %s2283 = ssub.s32 512, 512
      %2284 = vsyncadd [#allocation4], %s2283
      %s2286 = sshll.u32 [#allocation5], 4
      %s2287 = int_to_ptr.vmem [resolvable:$true] %s2286
      %2289 = dma.vmem_to_hbm [thread:$0]  %s2287, 512, %s4, [#allocation4]
    $region25: #{tpu_custom_call.1} parent=1 // pred_fallthru
      _
    // Predicated region
    $region26: #{tpu_custom_call.1} parent=1 // pred_check
      _
    $region27: #{tpu_custom_call.1} parent=1 // pred_check_branch
      %2291 = sbr.rel (0) target = $region29
    $region28: #{tpu_custom_call.1} parent=1 // pred_region
      %2292 = dma.done [#allocation4], 512
    $region29: #{tpu_custom_call.1} parent=1 // pred_fallthru
      _
    %2293 = vsyncpa [#allocation3], 1
    %2294 = vsyncpa [#allocation4], 1

</llo_original>
